<compile_context>
chip_gen: v7x
topology: tpu7x:2x2x1
jax: 0.10.0
libtpu: 0.0.40
codegen_flags: <defaults>
</compile_context>

<pallas_src>
import math
from functools import partial

import jax
import jax.numpy as jnp
from jax.experimental import pallas as pl
from jax.experimental.pallas import tpu as pltpu


# ----------------------------------------------------------------------------
# math helpers (only ops with guaranteed Mosaic lowerings)
# ----------------------------------------------------------------------------
def _layernorm(v, g, b, eps=1e-5):
    mu = jnp.mean(v, axis=-1, keepdims=True)
    var = jnp.mean((v - mu) ** 2, axis=-1, keepdims=True)
    return (v - mu) * jax.lax.rsqrt(var + eps) * g + b


_GELU_C = math.sqrt(2.0 / math.pi)


def _gelu_tanh(x):
    # tanh-approx GELU: jnp.tanh lowers to the EUP (its own VLIW slot), keeping the
    # FFN MXU-bound instead of VALU-bound.  |err| vs exact erf-GELU < ~3e-3.
    return 0.5 * x * (1.0 + jnp.tanh(_GELU_C * (x + 0.044715 * x * x * x)))


# ----------------------------------------------------------------------------
# fused transformer kernel: one grid step = one layer, activations stay resident
# ----------------------------------------------------------------------------
def transformer_kernel(x_ref, pos_ref, wqkv_ref, wout_ref, wff1_ref, wff2_ref,
                       vec_ref, o_ref, *, batch, heads, d_head, n_tokens,
                       dim, mlp_dim, scale, all_attn, w_dtype):
    B, H, d, N, D, M = batch, heads, d_head, n_tokens, dim, mlp_dim
    lidx = pl.program_id(0)

    # layer 0: load the activations into the VMEM-resident output block
    @pl.when(lidx == 0)
    def _():
        o_ref[...] = x_ref[...]

    xs = o_ref[...]                                   # (R, D) f32 activations

    # fused `x[:, num_bp:] += pos` for idx > 0, computed in registers (no extra
    # full-slab store/reload).  pos_ref is a single (N, D) slab (zeros on the
    # body-part rows) broadcast over the batch with a sublane concat — it is NOT
    # tiled B times in HBM/VMEM.
    if all_attn:
        gate = jnp.where(lidx > 0, 1.0, 0.0).astype(xs.dtype)
        pos_g = pos_ref[...] * gate                   # (N, D)
        xs = xs + jnp.concatenate([pos_g] * B, axis=0)

    vec = vec_ref[0]                                  # (8, C) packed per-layer vectors
    ln1_g, ln1_b = vec[0:1, 0:D], vec[1:2, 0:D]
    ln2_g, ln2_b = vec[2:3, 0:D], vec[3:4, 0:D]
    b_qkv = vec[4:5, 0:3 * D]
    b_out = vec[5:6, 0:D]
    b_ff1 = vec[6:7, 0:M]
    b_ff2 = vec[7:8, 0:D]

    # ---- pre-norm 1 + multi-head self-attention -------------------------------------
    xn = _layernorm(xs, ln1_g, ln1_b)                 # (R, D) f32
    # single lane-dense qkv projection: (R, D) @ (D, 3D), bf16 operands, f32 accumulate
    qkv = jnp.dot(xn.astype(w_dtype), wqkv_ref[0],
                  preferred_element_type=jnp.float32) + b_qkv        # (R, 3D)

    q = qkv[:, 0:D] * scale                           # fold softmax scale into q
    k = qkv[:, D:2 * D]
    v = qkv[:, 2 * D:3 * D]

    # split heads: (R, D) -> (B*H, N, d) with g = b*H + h.  Pure static lane/sublane
    # slices + leading-dim stacks/concats (no lane-splitting reshapes), so it lowers
    # for any N / d_head.
    def split_heads(t):
        per_b = []
        for b in range(B):
            tb = t[b * N:(b + 1) * N, :]                                        # (N, D)
            per_b.append(jnp.stack([tb[:, h * d:(h + 1) * d] for h in range(H)],
                                   axis=0))                                     # (H, N, d)
        return jnp.concatenate(per_b, axis=0)                                   # (B*H, N, d)

    qh, kh, vh = split_heads(q), split_heads(k), split_heads(v)

    # attention batched over G = B*H with single leading-batch-dim dot_generals
    dots = jnp.einsum('gnd,gmd->gnm', qh, kh,
                      preferred_element_type=jnp.float32)            # (G, N, N)
    dots = dots - jnp.max(dots, axis=-1, keepdims=True)
    e = jnp.exp(dots)
    attn = e * pl.reciprocal(jnp.sum(e, axis=-1, keepdims=True), approx=True)
    oh = jnp.einsum('gnm,gmd->gnd', attn, vh,
                    preferred_element_type=jnp.float32)              # (G, N, d)

    # merge heads back into lanes -> (R, D); concat('h d') @ W_out is then ONE
    # lane-dense K=D matmul (no per-head K=d matmuls, no cross-sublane head sum).
    def merge_heads(t):
        rows = []
        for b in range(B):
            rows.append(jnp.concatenate([t[b * H + h] for h in range(H)], axis=-1))
        return jnp.concatenate(rows, axis=0)                                    # (R, D)

    attn_cat = merge_heads(oh)
    attn_out = jnp.dot(attn_cat.astype(w_dtype), wout_ref[0],
                       preferred_element_type=jnp.float32) + b_out
    x1 = xs + attn_out                                # residual 1

    # ---- pre-norm 2 + feed-forward (un-padded bf16 weights, f32 accumulation) -------
    xn2 = _layernorm(x1, ln2_g, ln2_b)
    h1 = jnp.dot(xn2.astype(w_dtype), wff1_ref[0],
                 preferred_element_type=jnp.float32) + b_ff1         # (R, M)
    h1 = _gelu_tanh(h1)
    ff = jnp.dot(h1.astype(w_dtype), wff2_ref[0],
                 preferred_element_type=jnp.float32) + b_ff2         # (R, D)

    o_ref[...] = x1 + ff                              # residual 2; stays resident


# ----------------------------------------------------------------------------
# host-side parameter packing: depth-stacked, un-padded, bf16 weights
# ----------------------------------------------------------------------------
def pack_params(params, weight_dtype=jnp.bfloat16):
    D = params[0]["w_qkv"].shape[0]
    M = params[0]["w_ff1"].shape[1]
    C = max(3 * D, M)

    w_qkv = jnp.stack([p["w_qkv"] for p in params]).astype(weight_dtype)  # (L, D, 3D)
    w_out = jnp.stack([p["w_out"] for p in params]).astype(weight_dtype)  # (L, D, D)
    w_ff1 = jnp.stack([p["w_ff1"] for p in params]).astype(weight_dtype)  # (L, D, M)
    w_ff2 = jnp.stack([p["w_ff2"] for p in params]).astype(weight_dtype)  # (L, M, D)

    # all per-layer vectors (ln gains/biases + linear biases) in one (8, C) f32 tile
    def vec_slab(p):
        v = jnp.zeros((8, C), jnp.float32)
        v = v.at[0, 0:D].set(p["ln1_g"])
        v = v.at[1, 0:D].set(p["ln1_b"])
        v = v.at[2, 0:D].set(p["ln2_g"])
        v = v.at[3, 0:D].set(p["ln2_b"])
        v = v.at[4, 0:3 * D].set(p["b_qkv"])
        v = v.at[5, 0:D].set(p["b_out"])
        v = v.at[6, 0:M].set(p["b_ff1"])
        v = v.at[7, 0:D].set(p["b_ff2"])
        return v

    vecs = jnp.stack([vec_slab(p) for p in params])                       # (L, 8, C)
    return dict(w_qkv=w_qkv, w_out=w_out, w_ff1=w_ff1, w_ff2=w_ff2, vecs=vecs)


# ----------------------------------------------------------------------------
# wrapper: one pallas_call for the whole transformer stack
# ----------------------------------------------------------------------------
def transformer_forward(x, params, pos, *, heads, scale, all_attn, num_bp,
                        weight_dtype=jnp.bfloat16, vmem_limit_bytes=None):
    B, N, D = x.shape
    depth = len(params)
    M = params[0]["w_ff1"].shape[1]
    assert D % heads == 0
    d = D // heads
    num_kp = N - num_bp
    R = B * N
    C = max(3 * D, M)

    packed = pack_params(params, weight_dtype=weight_dtype)

    # single (N, D) pos slab (zeros on body-part token rows); NOT tiled over batch.
    if pos is None:
        pos_slab = jnp.zeros((N, D), x.dtype)
    else:
        pos_slab = jnp.zeros((N, D), x.dtype).at[num_bp:, :].set(
            jnp.asarray(pos, x.dtype).reshape(num_kp, D))

    x2 = x.reshape(R, D)                              # fold batch into matmul rows

    kernel = partial(transformer_kernel, batch=B, heads=heads, d_head=d,
                     n_tokens=N, dim=D, mlp_dim=M, scale=scale,
                     all_attn=all_attn, w_dtype=weight_dtype)

    if vmem_limit_bytes is None:
        # double-buffered per-layer weights + resident activations / pos + headroom.
        wsz = jnp.dtype(weight_dtype).itemsize
        per_layer_w = (3 * D * D + D * D + 2 * D * M) * wsz + 8 * C * 4
        resident = 2 * R * D * 4 + N * D * 4
        vmem_limit_bytes = max(2 * per_layer_w + resident + (8 << 20), 32 << 20)
        # TODO(synk): at dims where this exceeds v7x's 64 MiB/TC, tile the FFN / qkv
        #             weights along K/M (extra grid axis or pltpu.emit_pipeline)
        #             instead of just raising the limit.

    grid_spec = pltpu.PrefetchScalarGridSpec(
        num_scalar_prefetch=0,
        grid=(depth,),                                # depth-resident activations
        in_specs=[
            pl.BlockSpec((R, D), lambda l: (0, 0)),            # activations (layer 0)
            pl.BlockSpec((N, D), lambda l: (0, 0)),            # pos slab (resident)
            pl.BlockSpec((1, D, 3 * D), lambda l: (l, 0, 0)),  # qkv weight, layer l
            pl.BlockSpec((1, D, D), lambda l: (l, 0, 0)),      # out-proj weight
            pl.BlockSpec((1, D, M), lambda l: (l, 0, 0)),      # ffn W1 (un-padded)
            pl.BlockSpec((1, M, D), lambda l: (l, 0, 0)),      # ffn W2 (un-padded)
            pl.BlockSpec((1, 8, C), lambda l: (l, 0, 0)),      # ln / bias vectors
        ],
        out_specs=pl.BlockSpec((R, D), lambda l: (0, 0)),
    )

    out = pl.pallas_call(
        kernel,
        out_shape=jax.ShapeDtypeStruct((R, D), x.dtype),
        grid_spec=grid_spec,
        compiler_params=pltpu.CompilerParams(
            dimension_semantics=("arbitrary",),
            vmem_limit_bytes=int(vmem_limit_bytes)),
    )(x2, pos_slab, packed["w_qkv"], packed["w_out"],
      packed["w_ff1"], packed["w_ff2"], packed["vecs"])
    return out.reshape(B, N, D)


# ----------------------------------------------------------------------------
# pure-JAX reference (mirrors the PyTorch module, mask=None / eval mode)
# ----------------------------------------------------------------------------
def transformer_reference(x, params, pos, *, heads, scale, all_attn, num_bp):
    B, N, D = x.shape
    d = D // heads

    def ln(v, g, b):
        mu = v.mean(-1, keepdims=True)
        var = ((v - mu) ** 2).mean(-1, keepdims=True)
        return (v - mu) / jnp.sqrt(var + 1e-5) * g + b

    def layer(x, p):
        xn = ln(x, p["ln1_g"], p["ln1_b"])
        qkv = xn @ p["w_qkv"] + p["b_qkv"]
        q, k, v = jnp.split(qkv, 3, axis=-1)
        split = lambda t: t.reshape(B, N, heads, d).transpose(0, 2, 1, 3)
        q, k, v = split(q), split(k), split(v)
        dots = jnp.einsum('bhid,bhjd->bhij', q, k) * scale
        attn = jax.nn.softmax(dots, axis=-1)
        out = jnp.einsum('bhij,bhjd->bhid', attn, v)
        out = out.transpose(0, 2, 1, 3).reshape(B, N, D)
        out = out @ p["w_out"] + p["b_out"]
        x1 = x + out
        xn2 = ln(x1, p["ln2_g"], p["ln2_b"])
        h = xn2 @ p["w_ff1"] + p["b_ff1"]
        h = 0.5 * h * (1.0 + jax.scipy.special.erf(h / math.sqrt(2.0)))
        ff = h @ p["w_ff2"] + p["b_ff2"]
        return x1 + ff

    for idx, p in enumerate(params):
        if idx > 0 and all_attn:
            x = x.at[:, num_bp:, :].add(pos)
        x = layer(x, p)
    return x


def init_transformer_params(key, depth, dim, mlp_dim):
    params = []
    for _ in range(depth):
        key, k0, k1, k2, k3, k4, k5 = jax.random.split(key, 7)
        params.append({
            "ln1_g": jnp.ones((dim,), jnp.float32),
            "ln1_b": jnp.zeros((dim,), jnp.float32),
            "w_qkv": 0.02 * jax.random.normal(k0, (dim, 3 * dim), jnp.float32),
            "b_qkv": 0.02 * jax.random.normal(k1, (3 * dim,), jnp.float32),
            "w_out": 0.02 * jax.random.normal(k2, (dim, dim), jnp.float32),
            "b_out": 0.02 * jax.random.normal(k3, (dim,), jnp.float32),
            "ln2_g": jnp.ones((dim,), jnp.float32),
            "ln2_b": jnp.zeros((dim,), jnp.float32),
            "w_ff1": 0.02 * jax.random.normal(k4, (dim, mlp_dim), jnp.float32),
            "b_ff1": jnp.zeros((mlp_dim,), jnp.float32),
            "w_ff2": 0.02 * jax.random.normal(k5, (mlp_dim, dim), jnp.float32),
            "b_ff2": jnp.zeros((dim,), jnp.float32),
        })
    return params


if __name__ == "__main__":
    # small but representative shapes
    B = 2
    num_keypoints, num_bp = 6, 2
    N = num_keypoints + num_bp        # token count = body-part tokens + keypoint tokens
    dim, heads, depth, mlp_dim = 32, 4, 2, 64
    scale_with_head = False
    scale = (dim // heads) ** (-0.5) if scale_with_head else dim ** (-0.5)
    all_attn = True

    key = jax.random.PRNGKey(0)
    kx, kpos, kparams = jax.random.split(key, 3)
    x = jax.random.normal(kx, (B, N, dim), jnp.float32)
    pos = jax.random.normal(kpos, (1, num_keypoints, dim), jnp.float32)
    params = init_transformer_params(kparams, depth, dim, mlp_dim)

    out = transformer_forward(x, params, pos, heads=heads, scale=scale,
                              all_attn=all_attn, num_bp=num_bp)
    jax.block_until_ready(out)
    assert out.shape == (B, N, dim) and out.dtype == jnp.float32

    ref = transformer_reference(x, params, pos, heads=heads, scale=scale,
                                all_attn=all_attn, num_bp=num_bp)
    err = float(jnp.max(jnp.abs(out - ref)))
    assert err < 3e-2, f"max abs error too large: {err}"
    print("KERNEL_OK")
</pallas_src>

<mosaic_0001>
module attributes {stable_mosaic.version = 11 : i64} {
  func.func @transformer_kernel(%arg0: i32, %arg1: memref<16x32xf32, #tpu.memory_space<vmem>>, %arg2: memref<8x32xf32, #tpu.memory_space<vmem>>, %arg3: memref<1x32x96xbf16, #tpu.memory_space<vmem>>, %arg4: memref<1x32x32xbf16, #tpu.memory_space<vmem>>, %arg5: memref<1x32x64xbf16, #tpu.memory_space<vmem>>, %arg6: memref<1x64x32xbf16, #tpu.memory_space<vmem>>, %arg7: memref<1x8x96xf32, #tpu.memory_space<vmem>>, %arg8: memref<16x32xf32, #tpu.memory_space<vmem>>) attributes {dimension_semantics = [#tpu.dimension_semantics<arbitrary>], iteration_bounds = array<i64: 2>, scalar_prefetch = 0 : i64, scratch_operands = 0 : i64, tpu.core_type = #tpu.core_type<tc>, window_params = [{pipeline_mode = #tpu.pipeline_mode<synchronous>, transform_indices = @transform_0, window_bounds = array<i64: 16, 32>}, {pipeline_mode = #tpu.pipeline_mode<synchronous>, transform_indices = @transform_1, window_bounds = array<i64: 8, 32>}, {transform_indices = @transform_2, window_bounds = array<i64: 1, 32, 96>}, {transform_indices = @transform_3, window_bounds = array<i64: 1, 32, 32>}, {transform_indices = @transform_4, window_bounds = array<i64: 1, 32, 64>}, {transform_indices = @transform_5, window_bounds = array<i64: 1, 64, 32>}, {transform_indices = @transform_6, window_bounds = array<i64: 1, 8, 96>}, {pipeline_mode = #tpu.pipeline_mode<synchronous>, transform_indices = @transform_7, window_bounds = array<i64: 16, 32>}]} {
    %c0_i32 = arith.constant 0 : i32
    %0 = arith.cmpi eq, %arg0, %c0_i32 : i32
    %1 = arith.extui %0 : i1 to i32
    %c0_i32_0 = arith.constant 0 : i32
    %2 = arith.cmpi ne, %1, %c0_i32_0 : i32
    scf.if %2 {
      %c0_46 = arith.constant 0 : index
      %c0_47 = arith.constant 0 : index
      %204 = vector.load %arg1[%c0_46, %c0_47] : memref<16x32xf32, #tpu.memory_space<vmem>>, vector<16x32xf32>
      %c0_48 = arith.constant 0 : index
      %c0_49 = arith.constant 0 : index
      %205 = vector.load %arg8[%c0_48, %c0_49] : memref<16x32xf32, #tpu.memory_space<vmem>>, vector<16x32xf32>
      tpu.vector_store %arg8[%c0_48, %c0_49], %204 {strides = array<i32>} : memref<16x32xf32, #tpu.memory_space<vmem>>, vector<16x32xf32>,
    } else {
    }
    %c0 = arith.constant 0 : index
    %c0_1 = arith.constant 0 : index
    %3 = vector.load %arg8[%c0, %c0_1] : memref<16x32xf32, #tpu.memory_space<vmem>>, vector<16x32xf32>
    %c0_i32_2 = arith.constant 0 : i32
    %4 = arith.cmpi sgt, %arg0, %c0_i32_2 : i32
    %cst = arith.constant 1.000000e+00 : f32
    %cst_3 = arith.constant 0.000000e+00 : f32
    %5 = arith.select %4, %cst, %cst_3 : f32
    %c0_4 = arith.constant 0 : index
    %c0_5 = arith.constant 0 : index
    %6 = vector.load %arg2[%c0_4, %c0_5] : memref<8x32xf32, #tpu.memory_space<vmem>>, vector<8x32xf32>
    %7 = vector.broadcast %5 : f32 to vector<8x32xf32>
    %8 = arith.mulf %6, %7 : vector<8x32xf32>
    %9 = tpu.concatenate %8, %8 in 0 : vector<8x32xf32>, vector<8x32xf32> -> vector<16x32xf32>
    %10 = arith.addf %3, %9 : vector<16x32xf32>
    %c0_6 = arith.constant 0 : index
    %c0_7 = arith.constant 0 : index
    %c0_8 = arith.constant 0 : index
    %11 = vector.load %arg7[%c0_6, %c0_7, %c0_8] : memref<1x8x96xf32, #tpu.memory_space<vmem>>, vector<1x8x96xf32>
    %12 = vector.shape_cast %11 : vector<1x8x96xf32> to vector<8x96xf32>
    %13 = vector.extract_strided_slice %12 {offsets = [0, 0], sizes = [1, 32], strides = [1, 1]} : vector<8x96xf32> to vector<1x32xf32>
    %14 = vector.extract_strided_slice %12 {offsets = [1, 0], sizes = [1, 32], strides = [1, 1]} : vector<8x96xf32> to vector<1x32xf32>
    %15 = vector.extract_strided_slice %12 {offsets = [2, 0], sizes = [1, 32], strides = [1, 1]} : vector<8x96xf32> to vector<1x32xf32>
    %16 = vector.extract_strided_slice %12 {offsets = [3, 0], sizes = [1, 32], strides = [1, 1]} : vector<8x96xf32> to vector<1x32xf32>
    %17 = vector.extract_strided_slice %12 {offsets = [4, 0], sizes = [1, 96], strides = [1, 1]} : vector<8x96xf32> to vector<1x96xf32>
    %18 = vector.extract_strided_slice %12 {offsets = [5, 0], sizes = [1, 32], strides = [1, 1]} : vector<8x96xf32> to vector<1x32xf32>
    %19 = vector.extract_strided_slice %12 {offsets = [6, 0], sizes = [1, 64], strides = [1, 1]} : vector<8x96xf32> to vector<1x64xf32>
    %20 = vector.extract_strided_slice %12 {offsets = [7, 0], sizes = [1, 32], strides = [1, 1]} : vector<8x96xf32> to vector<1x32xf32>
    %cst_9 = arith.constant dense<0.000000e+00> : vector<16xf32>
    %21 = vector.multi_reduction <add>, %10, %cst_9 [1] : vector<16x32xf32> to vector<16xf32>
    %22 = vector.shape_cast %21 : vector<16xf32> to vector<16x1xf32>
    %cst_10 = arith.constant 3.200000e+01 : f32
    %23 = vector.broadcast %cst_10 : f32 to vector<16x1xf32>
    %24 = arith.divf %22, %23 : vector<16x1xf32>
    %25 = vector.broadcast %24 : vector<16x1xf32> to vector<16x32xf32>
    %26 = arith.subf %10, %25 : vector<16x32xf32>
    %27 = arith.mulf %26, %26 : vector<16x32xf32>
    %cst_11 = arith.constant dense<0.000000e+00> : vector<16xf32>
    %28 = vector.multi_reduction <add>, %27, %cst_11 [1] : vector<16x32xf32> to vector<16xf32>
    %29 = vector.shape_cast %28 : vector<16xf32> to vector<16x1xf32>
    %cst_12 = arith.constant 3.200000e+01 : f32
    %30 = vector.broadcast %cst_12 : f32 to vector<16x1xf32>
    %31 = arith.divf %29, %30 : vector<16x1xf32>
    %32 = vector.broadcast %24 : vector<16x1xf32> to vector<16x32xf32>
    %33 = arith.subf %10, %32 : vector<16x32xf32>
    %cst_13 = arith.constant 9.99999974E-6 : f32
    %34 = vector.broadcast %cst_13 : f32 to vector<16x1xf32>
    %35 = arith.addf %31, %34 : vector<16x1xf32>
    %36 = math.rsqrt %35 : vector<16x1xf32>
    %37 = vector.broadcast %36 : vector<16x1xf32> to vector<16x32xf32>
    %38 = arith.mulf %33, %37 : vector<16x32xf32>
    %39 = vector.broadcast %13 : vector<1x32xf32> to vector<16x32xf32>
    %40 = arith.mulf %38, %39 : vector<16x32xf32>
    %41 = vector.broadcast %14 : vector<1x32xf32> to vector<16x32xf32>
    %42 = arith.addf %40, %41 : vector<16x32xf32>
    %43 = arith.truncf %42 : vector<16x32xf32> to vector<16x32xbf16>
    %c0_14 = arith.constant 0 : index
    %c0_15 = arith.constant 0 : index
    %c0_16 = arith.constant 0 : index
    %44 = vector.load %arg3[%c0_14, %c0_15, %c0_16] : memref<1x32x96xbf16, #tpu.memory_space<vmem>>, vector<1x32x96xbf16>
    %45 = vector.shape_cast %44 : vector<1x32x96xbf16> to vector<32x96xbf16>
    %cst_17 = arith.constant dense<0.000000e+00> : vector<16x96xf32>
    %46 = tpu.matmul %43, %45, %cst_17 {dimension_numbers = #tpu.dot_dimension_numbers<[1], [0], [0], [1], [0, 0, 1, 1], [], []>} : vector<16x32xbf16>, vector<32x96xbf16>, vector<16x96xf32> -> vector<16x96xf32>
    %47 = vector.broadcast %17 : vector<1x96xf32> to vector<16x96xf32>
    %48 = arith.addf %46, %47 : vector<16x96xf32>
    %49 = vector.extract_strided_slice %48 {offsets = [0, 0], sizes = [16, 32], strides = [1, 1]} : vector<16x96xf32> to vector<16x32xf32>
    %cst_18 = arith.constant 0.176776692 : f32
    %50 = vector.broadcast %cst_18 : f32 to vector<16x32xf32>
    %51 = arith.mulf %49, %50 : vector<16x32xf32>
    %52 = vector.extract_strided_slice %48 {offsets = [0, 32], sizes = [16, 32], strides = [1, 1]} : vector<16x96xf32> to vector<16x32xf32>
    %53 = vector.extract_strided_slice %48 {offsets = [0, 64], sizes = [16, 32], strides = [1, 1]} : vector<16x96xf32> to vector<16x32xf32>
    %54 = vector.extract_strided_slice %51 {offsets = [0, 0], sizes = [8, 32], strides = [1, 1]} : vector<16x32xf32> to vector<8x32xf32>
    %55 = vector.extract_strided_slice %54 {offsets = [0, 0], sizes = [8, 8], strides = [1, 1]} : vector<8x32xf32> to vector<8x8xf32>
    %56 = vector.extract_strided_slice %54 {offsets = [0, 8], sizes = [8, 8], strides = [1, 1]} : vector<8x32xf32> to vector<8x8xf32>
    %57 = vector.extract_strided_slice %54 {offsets = [0, 16], sizes = [8, 8], strides = [1, 1]} : vector<8x32xf32> to vector<8x8xf32>
    %58 = vector.extract_strided_slice %54 {offsets = [0, 24], sizes = [8, 8], strides = [1, 1]} : vector<8x32xf32> to vector<8x8xf32>
    %59 = vector.shape_cast %55 : vector<8x8xf32> to vector<1x8x8xf32>
    %60 = vector.shape_cast %56 : vector<8x8xf32> to vector<1x8x8xf32>
    %61 = vector.shape_cast %57 : vector<8x8xf32> to vector<1x8x8xf32>
    %62 = vector.shape_cast %58 : vector<8x8xf32> to vector<1x8x8xf32>
    %63 = tpu.concatenate %59, %60, %61, %62 in 0 : vector<1x8x8xf32>, vector<1x8x8xf32>, vector<1x8x8xf32>, vector<1x8x8xf32> -> vector<4x8x8xf32>
    %64 = vector.extract_strided_slice %51 {offsets = [8, 0], sizes = [8, 32], strides = [1, 1]} : vector<16x32xf32> to vector<8x32xf32>
    %65 = vector.extract_strided_slice %64 {offsets = [0, 0], sizes = [8, 8], strides = [1, 1]} : vector<8x32xf32> to vector<8x8xf32>
    %66 = vector.extract_strided_slice %64 {offsets = [0, 8], sizes = [8, 8], strides = [1, 1]} : vector<8x32xf32> to vector<8x8xf32>
    %67 = vector.extract_strided_slice %64 {offsets = [0, 16], sizes = [8, 8], strides = [1, 1]} : vector<8x32xf32> to vector<8x8xf32>
    %68 = vector.extract_strided_slice %64 {offsets = [0, 24], sizes = [8, 8], strides = [1, 1]} : vector<8x32xf32> to vector<8x8xf32>
    %69 = vector.shape_cast %65 : vector<8x8xf32> to vector<1x8x8xf32>
    %70 = vector.shape_cast %66 : vector<8x8xf32> to vector<1x8x8xf32>
    %71 = vector.shape_cast %67 : vector<8x8xf32> to vector<1x8x8xf32>
    %72 = vector.shape_cast %68 : vector<8x8xf32> to vector<1x8x8xf32>
    %73 = tpu.concatenate %69, %70, %71, %72 in 0 : vector<1x8x8xf32>, vector<1x8x8xf32>, vector<1x8x8xf32>, vector<1x8x8xf32> -> vector<4x8x8xf32>
    %74 = tpu.concatenate %63, %73 in 0 : vector<4x8x8xf32>, vector<4x8x8xf32> -> vector<8x8x8xf32>
    %75 = vector.extract_strided_slice %52 {offsets = [0, 0], sizes = [8, 32], strides = [1, 1]} : vector<16x32xf32> to vector<8x32xf32>
    %76 = vector.extract_strided_slice %75 {offsets = [0, 0], sizes = [8, 8], strides = [1, 1]} : vector<8x32xf32> to vector<8x8xf32>
    %77 = vector.extract_strided_slice %75 {offsets = [0, 8], sizes = [8, 8], strides = [1, 1]} : vector<8x32xf32> to vector<8x8xf32>
    %78 = vector.extract_strided_slice %75 {offsets = [0, 16], sizes = [8, 8], strides = [1, 1]} : vector<8x32xf32> to vector<8x8xf32>
    %79 = vector.extract_strided_slice %75 {offsets = [0, 24], sizes = [8, 8], strides = [1, 1]} : vector<8x32xf32> to vector<8x8xf32>
    %80 = vector.shape_cast %76 : vector<8x8xf32> to vector<1x8x8xf32>
    %81 = vector.shape_cast %77 : vector<8x8xf32> to vector<1x8x8xf32>
    %82 = vector.shape_cast %78 : vector<8x8xf32> to vector<1x8x8xf32>
    %83 = vector.shape_cast %79 : vector<8x8xf32> to vector<1x8x8xf32>
    %84 = tpu.concatenate %80, %81, %82, %83 in 0 : vector<1x8x8xf32>, vector<1x8x8xf32>, vector<1x8x8xf32>, vector<1x8x8xf32> -> vector<4x8x8xf32>
    %85 = vector.extract_strided_slice %52 {offsets = [8, 0], sizes = [8, 32], strides = [1, 1]} : vector<16x32xf32> to vector<8x32xf32>
    %86 = vector.extract_strided_slice %85 {offsets = [0, 0], sizes = [8, 8], strides = [1, 1]} : vector<8x32xf32> to vector<8x8xf32>
    %87 = vector.extract_strided_slice %85 {offsets = [0, 8], sizes = [8, 8], strides = [1, 1]} : vector<8x32xf32> to vector<8x8xf32>
    %88 = vector.extract_strided_slice %85 {offsets = [0, 16], sizes = [8, 8], strides = [1, 1]} : vector<8x32xf32> to vector<8x8xf32>
    %89 = vector.extract_strided_slice %85 {offsets = [0, 24], sizes = [8, 8], strides = [1, 1]} : vector<8x32xf32> to vector<8x8xf32>
    %90 = vector.shape_cast %86 : vector<8x8xf32> to vector<1x8x8xf32>
    %91 = vector.shape_cast %87 : vector<8x8xf32> to vector<1x8x8xf32>
    %92 = vector.shape_cast %88 : vector<8x8xf32> to vector<1x8x8xf32>
    %93 = vector.shape_cast %89 : vector<8x8xf32> to vector<1x8x8xf32>
    %94 = tpu.concatenate %90, %91, %92, %93 in 0 : vector<1x8x8xf32>, vector<1x8x8xf32>, vector<1x8x8xf32>, vector<1x8x8xf32> -> vector<4x8x8xf32>
    %95 = tpu.concatenate %84, %94 in 0 : vector<4x8x8xf32>, vector<4x8x8xf32> -> vector<8x8x8xf32>
    %96 = vector.extract_strided_slice %53 {offsets = [0, 0], sizes = [8, 32], strides = [1, 1]} : vector<16x32xf32> to vector<8x32xf32>
    %97 = vector.extract_strided_slice %96 {offsets = [0, 0], sizes = [8, 8], strides = [1, 1]} : vector<8x32xf32> to vector<8x8xf32>
    %98 = vector.extract_strided_slice %96 {offsets = [0, 8], sizes = [8, 8], strides = [1, 1]} : vector<8x32xf32> to vector<8x8xf32>
    %99 = vector.extract_strided_slice %96 {offsets = [0, 16], sizes = [8, 8], strides = [1, 1]} : vector<8x32xf32> to vector<8x8xf32>
    %100 = vector.extract_strided_slice %96 {offsets = [0, 24], sizes = [8, 8], strides = [1, 1]} : vector<8x32xf32> to vector<8x8xf32>
    %101 = vector.shape_cast %97 : vector<8x8xf32> to vector<1x8x8xf32>
    %102 = vector.shape_cast %98 : vector<8x8xf32> to vector<1x8x8xf32>
    %103 = vector.shape_cast %99 : vector<8x8xf32> to vector<1x8x8xf32>
    %104 = vector.shape_cast %100 : vector<8x8xf32> to vector<1x8x8xf32>
    %105 = tpu.concatenate %101, %102, %103, %104 in 0 : vector<1x8x8xf32>, vector<1x8x8xf32>, vector<1x8x8xf32>, vector<1x8x8xf32> -> vector<4x8x8xf32>
    %106 = vector.extract_strided_slice %53 {offsets = [8, 0], sizes = [8, 32], strides = [1, 1]} : vector<16x32xf32> to vector<8x32xf32>
    %107 = vector.extract_strided_slice %106 {offsets = [0, 0], sizes = [8, 8], strides = [1, 1]} : vector<8x32xf32> to vector<8x8xf32>
    %108 = vector.extract_strided_slice %106 {offsets = [0, 8], sizes = [8, 8], strides = [1, 1]} : vector<8x32xf32> to vector<8x8xf32>
    %109 = vector.extract_strided_slice %106 {offsets = [0, 16], sizes = [8, 8], strides = [1, 1]} : vector<8x32xf32> to vector<8x8xf32>
    %110 = vector.extract_strided_slice %106 {offsets = [0, 24], sizes = [8, 8], strides = [1, 1]} : vector<8x32xf32> to vector<8x8xf32>
    %111 = vector.shape_cast %107 : vector<8x8xf32> to vector<1x8x8xf32>
    %112 = vector.shape_cast %108 : vector<8x8xf32> to vector<1x8x8xf32>
    %113 = vector.shape_cast %109 : vector<8x8xf32> to vector<1x8x8xf32>
    %114 = vector.shape_cast %110 : vector<8x8xf32> to vector<1x8x8xf32>
    %115 = tpu.concatenate %111, %112, %113, %114 in 0 : vector<1x8x8xf32>, vector<1x8x8xf32>, vector<1x8x8xf32>, vector<1x8x8xf32> -> vector<4x8x8xf32>
    %116 = tpu.concatenate %105, %115 in 0 : vector<4x8x8xf32>, vector<4x8x8xf32> -> vector<8x8x8xf32>
    "tpu.trace_start"() <{level = 10 : i32, message = "gnd,gmd->gnm"}> : () -> ()
    %cst_19 = arith.constant dense<0.000000e+00> : vector<8x8x8xf32>
    %117 = tpu.matmul %74, %95, %cst_19 {dimension_numbers = #tpu.dot_dimension_numbers<[2], [2], [1], [1], [0, 0, 0, 1, 1, 1], [0], [0]>} : vector<8x8x8xf32>, vector<8x8x8xf32>, vector<8x8x8xf32> -> vector<8x8x8xf32>
    "tpu.trace_stop"() : () -> ()
    %cst_20 = arith.constant dense<0xFF800000> : vector<8x8xf32>
    %118 = vector.multi_reduction <maximumf>, %117, %cst_20 [2] : vector<8x8x8xf32> to vector<8x8xf32>
    %119 = vector.shape_cast %118 : vector<8x8xf32> to vector<8x8x1xf32>
    %120 = vector.broadcast %119 : vector<8x8x1xf32> to vector<8x8x8xf32>
    %121 = arith.subf %117, %120 : vector<8x8x8xf32>
    %122 = math.exp %121 : vector<8x8x8xf32>
    %cst_21 = arith.constant dense<0.000000e+00> : vector<8x8xf32>
    %123 = vector.multi_reduction <add>, %122, %cst_21 [2] : vector<8x8x8xf32> to vector<8x8xf32>
    %124 = vector.shape_cast %123 : vector<8x8xf32> to vector<8x8x1xf32>
    %125 = tpu.reciprocal %124 {approx = true} : vector<8x8x1xf32> -> vector<8x8x1xf32>
    %126 = vector.broadcast %125 : vector<8x8x1xf32> to vector<8x8x8xf32>
    %127 = arith.mulf %122, %126 : vector<8x8x8xf32>
    "tpu.trace_start"() <{level = 10 : i32, message = "gnm,gmd->gnd"}> : () -> ()
    %cst_22 = arith.constant dense<0.000000e+00> : vector<8x8x8xf32>
    %128 = tpu.matmul %127, %116, %cst_22 {dimension_numbers = #tpu.dot_dimension_numbers<[2], [1], [1], [2], [0, 0, 0, 1, 1, 2], [0], [0]>} : vector<8x8x8xf32>, vector<8x8x8xf32>, vector<8x8x8xf32> -> vector<8x8x8xf32>
    "tpu.trace_stop"() : () -> ()
    %129 = vector.extract_strided_slice %128 {offsets = [0, 0, 0], sizes = [1, 8, 8], strides = [1, 1, 1]} : vector<8x8x8xf32> to vector<1x8x8xf32>
    %130 = vector.shape_cast %129 : vector<1x8x8xf32> to vector<8x8xf32>
    %131 = vector.extract_strided_slice %128 {offsets = [1, 0, 0], sizes = [1, 8, 8], strides = [1, 1, 1]} : vector<8x8x8xf32> to vector<1x8x8xf32>
    %132 = vector.shape_cast %131 : vector<1x8x8xf32> to vector<8x8xf32>
    %133 = vector.extract_strided_slice %128 {offsets = [2, 0, 0], sizes = [1, 8, 8], strides = [1, 1, 1]} : vector<8x8x8xf32> to vector<1x8x8xf32>
    %134 = vector.shape_cast %133 : vector<1x8x8xf32> to vector<8x8xf32>
    %135 = vector.extract_strided_slice %128 {offsets = [3, 0, 0], sizes = [1, 8, 8], strides = [1, 1, 1]} : vector<8x8x8xf32> to vector<1x8x8xf32>
    %136 = vector.shape_cast %135 : vector<1x8x8xf32> to vector<8x8xf32>
    %137 = tpu.concatenate %130, %132, %134, %136 in 1 : vector<8x8xf32>, vector<8x8xf32>, vector<8x8xf32>, vector<8x8xf32> -> vector<8x32xf32>
    %138 = vector.extract_strided_slice %128 {offsets = [4, 0, 0], sizes = [1, 8, 8], strides = [1, 1, 1]} : vector<8x8x8xf32> to vector<1x8x8xf32>
    %139 = vector.shape_cast %138 : vector<1x8x8xf32> to vector<8x8xf32>
    %140 = vector.extract_strided_slice %128 {offsets = [5, 0, 0], sizes = [1, 8, 8], strides = [1, 1, 1]} : vector<8x8x8xf32> to vector<1x8x8xf32>
    %141 = vector.shape_cast %140 : vector<1x8x8xf32> to vector<8x8xf32>
    %142 = vector.extract_strided_slice %128 {offsets = [6, 0, 0], sizes = [1, 8, 8], strides = [1, 1, 1]} : vector<8x8x8xf32> to vector<1x8x8xf32>
    %143 = vector.shape_cast %142 : vector<1x8x8xf32> to vector<8x8xf32>
    %144 = vector.extract_strided_slice %128 {offsets = [7, 0, 0], sizes = [1, 8, 8], strides = [1, 1, 1]} : vector<8x8x8xf32> to vector<1x8x8xf32>
    %145 = vector.shape_cast %144 : vector<1x8x8xf32> to vector<8x8xf32>
    %146 = tpu.concatenate %139, %141, %143, %145 in 1 : vector<8x8xf32>, vector<8x8xf32>, vector<8x8xf32>, vector<8x8xf32> -> vector<8x32xf32>
    %147 = tpu.concatenate %137, %146 in 0 : vector<8x32xf32>, vector<8x32xf32> -> vector<16x32xf32>
    %148 = arith.truncf %147 : vector<16x32xf32> to vector<16x32xbf16>
    %c0_23 = arith.constant 0 : index
    %c0_24 = arith.constant 0 : index
    %c0_25 = arith.constant 0 : index
    %149 = vector.load %arg4[%c0_23, %c0_24, %c0_25] : memref<1x32x32xbf16, #tpu.memory_space<vmem>>, vector<1x32x32xbf16>
    %150 = vector.shape_cast %149 : vector<1x32x32xbf16> to vector<32x32xbf16>
    %cst_26 = arith.constant dense<0.000000e+00> : vector<16x32xf32>
    %151 = tpu.matmul %148, %150, %cst_26 {dimension_numbers = #tpu.dot_dimension_numbers<[1], [0], [0], [1], [0, 0, 1, 1], [], []>} : vector<16x32xbf16>, vector<32x32xbf16>, vector<16x32xf32> -> vector<16x32xf32>
    %152 = vector.broadcast %18 : vector<1x32xf32> to vector<16x32xf32>
    %153 = arith.addf %151, %152 : vector<16x32xf32>
    %154 = arith.addf %10, %153 : vector<16x32xf32>
    %cst_27 = arith.constant dense<0.000000e+00> : vector<16xf32>
    %155 = vector.multi_reduction <add>, %154, %cst_27 [1] : vector<16x32xf32> to vector<16xf32>
    %156 = vector.shape_cast %155 : vector<16xf32> to vector<16x1xf32>
    %cst_28 = arith.constant 3.200000e+01 : f32
    %157 = vector.broadcast %cst_28 : f32 to vector<16x1xf32>
    %158 = arith.divf %156, %157 : vector<16x1xf32>
    %159 = vector.broadcast %158 : vector<16x1xf32> to vector<16x32xf32>
    %160 = arith.subf %154, %159 : vector<16x32xf32>
    %161 = arith.mulf %160, %160 : vector<16x32xf32>
    %cst_29 = arith.constant dense<0.000000e+00> : vector<16xf32>
    %162 = vector.multi_reduction <add>, %161, %cst_29 [1] : vector<16x32xf32> to vector<16xf32>
    %163 = vector.shape_cast %162 : vector<16xf32> to vector<16x1xf32>
    %cst_30 = arith.constant 3.200000e+01 : f32
    %164 = vector.broadcast %cst_30 : f32 to vector<16x1xf32>
    %165 = arith.divf %163, %164 : vector<16x1xf32>
    %166 = vector.broadcast %158 : vector<16x1xf32> to vector<16x32xf32>
    %167 = arith.subf %154, %166 : vector<16x32xf32>
    %cst_31 = arith.constant 9.99999974E-6 : f32
    %168 = vector.broadcast %cst_31 : f32 to vector<16x1xf32>
    %169 = arith.addf %165, %168 : vector<16x1xf32>
    %170 = math.rsqrt %169 : vector<16x1xf32>
    %171 = vector.broadcast %170 : vector<16x1xf32> to vector<16x32xf32>
    %172 = arith.mulf %167, %171 : vector<16x32xf32>
    %173 = vector.broadcast %15 : vector<1x32xf32> to vector<16x32xf32>
    %174 = arith.mulf %172, %173 : vector<16x32xf32>
    %175 = vector.broadcast %16 : vector<1x32xf32> to vector<16x32xf32>
    %176 = arith.addf %174, %175 : vector<16x32xf32>
    %177 = arith.truncf %176 : vector<16x32xf32> to vector<16x32xbf16>
    %c0_32 = arith.constant 0 : index
    %c0_33 = arith.constant 0 : index
    %c0_34 = arith.constant 0 : index
    %178 = vector.load %arg5[%c0_32, %c0_33, %c0_34] : memref<1x32x64xbf16, #tpu.memory_space<vmem>>, vector<1x32x64xbf16>
    %179 = vector.shape_cast %178 : vector<1x32x64xbf16> to vector<32x64xbf16>
    %cst_35 = arith.constant dense<0.000000e+00> : vector<16x64xf32>
    %180 = tpu.matmul %177, %179, %cst_35 {dimension_numbers = #tpu.dot_dimension_numbers<[1], [0], [0], [1], [0, 0, 1, 1], [], []>} : vector<16x32xbf16>, vector<32x64xbf16>, vector<16x64xf32> -> vector<16x64xf32>
    %181 = vector.broadcast %19 : vector<1x64xf32> to vector<16x64xf32>
    %182 = arith.addf %180, %181 : vector<16x64xf32>
    %cst_36 = arith.constant 5.000000e-01 : f32
    %183 = vector.broadcast %cst_36 : f32 to vector<16x64xf32>
    %184 = arith.mulf %183, %182 : vector<16x64xf32>
    %cst_37 = arith.constant 4.471500e-02 : f32
    %185 = vector.broadcast %cst_37 : f32 to vector<16x64xf32>
    %186 = arith.mulf %185, %182 : vector<16x64xf32>
    %187 = arith.mulf %186, %182 : vector<16x64xf32>
    %188 = arith.mulf %187, %182 : vector<16x64xf32>
    %189 = arith.addf %182, %188 : vector<16x64xf32>
    %cst_38 = arith.constant 0.797884583 : f32
    %190 = vector.broadcast %cst_38 : f32 to vector<16x64xf32>
    %191 = arith.mulf %190, %189 : vector<16x64xf32>
    %192 = math.tanh %191 : vector<16x64xf32>
    %cst_39 = arith.constant 1.000000e+00 : f32
    %193 = vector.broadcast %cst_39 : f32 to vector<16x64xf32>
    %194 = arith.addf %193, %192 : vector<16x64xf32>
    %195 = arith.mulf %184, %194 : vector<16x64xf32>
    %196 = arith.truncf %195 : vector<16x64xf32> to vector<16x64xbf16>
    %c0_40 = arith.constant 0 : index
    %c0_41 = arith.constant 0 : index
    %c0_42 = arith.constant 0 : index
    %197 = vector.load %arg6[%c0_40, %c0_41, %c0_42] : memref<1x64x32xbf16, #tpu.memory_space<vmem>>, vector<1x64x32xbf16>
    %198 = vector.shape_cast %197 : vector<1x64x32xbf16> to vector<64x32xbf16>
    %cst_43 = arith.constant dense<0.000000e+00> : vector<16x32xf32>
    %199 = tpu.matmul %196, %198, %cst_43 {dimension_numbers = #tpu.dot_dimension_numbers<[1], [0], [0], [1], [0, 0, 1, 1], [], []>} : vector<16x64xbf16>, vector<64x32xbf16>, vector<16x32xf32> -> vector<16x32xf32>
    %200 = vector.broadcast %20 : vector<1x32xf32> to vector<16x32xf32>
    %201 = arith.addf %199, %200 : vector<16x32xf32>
    %202 = arith.addf %154, %201 : vector<16x32xf32>
    %c0_44 = arith.constant 0 : index
    %c0_45 = arith.constant 0 : index
    %203 = vector.load %arg8[%c0_44, %c0_45] : memref<16x32xf32, #tpu.memory_space<vmem>>, vector<16x32xf32>
    tpu.vector_store %arg8[%c0_44, %c0_45], %202 {strides = array<i32>} : memref<16x32xf32, #tpu.memory_space<vmem>>, vector<16x32xf32>,
    return
  }
  func.func @transform_0(%arg0: i32) -> (i32, i32) {
    %c0_i32 = arith.constant 0 : i32
    %c0_i32_0 = arith.constant 0 : i32
    %c0_i32_1 = arith.constant 0 : i32
    return %c0_i32, %c0_i32_0 : i32, i32
  }
  func.func @transform_1(%arg0: i32) -> (i32, i32) {
    %c0_i32 = arith.constant 0 : i32
    %c0_i32_0 = arith.constant 0 : i32
    %c0_i32_1 = arith.constant 0 : i32
    return %c0_i32, %c0_i32_0 : i32, i32
  }
  func.func @transform_2(%arg0: i32) -> (i32, i32, i32) {
    %c0_i32 = arith.constant 0 : i32
    %c0_i32_0 = arith.constant 0 : i32
    %c0_i32_1 = arith.constant 0 : i32
    return %arg0, %c0_i32, %c0_i32_0 : i32, i32, i32
  }
  func.func @transform_3(%arg0: i32) -> (i32, i32, i32) {
    %c0_i32 = arith.constant 0 : i32
    %c0_i32_0 = arith.constant 0 : i32
    %c0_i32_1 = arith.constant 0 : i32
    return %arg0, %c0_i32, %c0_i32_0 : i32, i32, i32
  }
  func.func @transform_4(%arg0: i32) -> (i32, i32, i32) {
    %c0_i32 = arith.constant 0 : i32
    %c0_i32_0 = arith.constant 0 : i32
    %c0_i32_1 = arith.constant 0 : i32
    return %arg0, %c0_i32, %c0_i32_0 : i32, i32, i32
  }
  func.func @transform_5(%arg0: i32) -> (i32, i32, i32) {
    %c0_i32 = arith.constant 0 : i32
    %c0_i32_0 = arith.constant 0 : i32
    %c0_i32_1 = arith.constant 0 : i32
    return %arg0, %c0_i32, %c0_i32_0 : i32, i32, i32
  }
  func.func @transform_6(%arg0: i32) -> (i32, i32, i32) {
    %c0_i32 = arith.constant 0 : i32
    %c0_i32_0 = arith.constant 0 : i32
    %c0_i32_1 = arith.constant 0 : i32
    return %arg0, %c0_i32, %c0_i32_0 : i32, i32, i32
  }
  func.func @transform_7(%arg0: i32) -> (i32, i32) {
    %c0_i32 = arith.constant 0 : i32
    %c0_i32_0 = arith.constant 0 : i32
    %c0_i32_1 = arith.constant 0 : i32
    return %c0_i32, %c0_i32_0 : i32, i32
  }
}

</mosaic_0001>

<llo_original>
// kernel: tpu_custom_call.1
$region0: #{tpu_custom_call.1}
  #allocation0 [shape = 'u32[]', space=smem, size = 0x4, offset = 0x4, fixed_abs, tag = 'smem constant byte address 0x4 - core index']
  #allocation1 [shape = 'u32[144,128]{1,0:T(1,128)}', space=vmem, size = 0x12000, scoped, tag = 'internal scratch']
  %s0 = inlined_call_operand.hbm [shape: f32[16,32], index: 0, kind: input, shape index: {}]
  %s1 = inlined_call_operand.hbm [shape: f32[8,32], index: 1, kind: input, shape index: {}]
  %s2 = inlined_call_operand.vmem [shape: bf16[2,32,96], index: 2, kind: input, shape index: {}]
  %s3 = inlined_call_operand.vmem [shape: bf16[2,32,32], index: 3, kind: input, shape index: {}]
  %s4 = inlined_call_operand.vmem [shape: bf16[2,32,64], index: 4, kind: input, shape index: {}]
  %s5 = inlined_call_operand.vmem [shape: bf16[2,64,32], index: 5, kind: input, shape index: {}]
  %s6 = inlined_call_operand.vmem [shape: f32[2,8,96], index: 6, kind: input, shape index: {}]
  %s7 = inlined_call_operand.hbm [shape: f32[16,32], index: 7, kind: output, shape index: {}]
  %s8 = sld [smem:[#allocation0]]
  $region73: #{tpu_custom_call.1} parent=0
    _
  %s10 = ssub.s32 1, %s8
  %s11 = scalar_select 0, %s10, %s8
  $region1: #{tpu_custom_call.1} parent=0
    #allocation2 [shape = 'u8[8192]{0}', space=vmem, size = 0x2000, scoped, tag = 'input window, operand 0, single buffered']
    #allocation3 [shape = 's32[2]{0}', space=sflag, size = 0x8, scoped, tag = 'scoped memory for tpu_custom_call.1']
    #allocation4 [shape = 's32[2]{0}', space=sflag, size = 0x8, scoped, tag = 'scoped memory for tpu_custom_call.1']
    #allocation5 [shape = 'u8[4096]{0}', space=vmem, size = 0x1000, scoped, tag = 'input window, operand 1, single buffered']
    #allocation6 [shape = 's32[1]{0}', space=sflag, size = 0x4, scoped, tag = 'scoped memory for tpu_custom_call.1']
    #allocation7 [shape = 'u8[8192]{0}', space=vmem, size = 0x2000, scoped, tag = 'output window, operand 0, single buffered']
    %12 = vsyncpa [#allocation3], 0
    %13 = vsyncpa [#allocation6], 0
    %14 = vsyncpa [#allocation4], 0
    loop: start=0, step=1, limit=4
    $region2: #{tpu_custom_call.1} parent=1 // loop_pre_header
      _
    $region3: #{tpu_custom_call.1} parent=1 // loop_header
      %s16 = sphi 0, %s20
      %p17 = scmp.ge.s32.totalorder %s16, 4
      %s24 = sphi 0, %s24
      %s26 = sphi 0, %s24
      %s27 = sphi 0, %s26
      %s41 = sphi 0, %s27
      %s45 = sphi 0, %s45
      %s47 = sphi 0, %s45
      %s48 = sphi 0, %s47
      %s62 = sphi 0, %s48
      %s68 = sphi 0, %s70
      %s71 = sphi 0, %s68
      %s72 = sphi 0, %s71
      %s88 = sphi 0, %s72
      %s94 = sphi 0, %s96
      %s97 = sphi 0, %s94
      %s98 = sphi 0, %s97
      %s114 = sphi 0, %s98
      %s120 = sphi 0, %s122
      %s123 = sphi 0, %s120
      %s124 = sphi 0, %s123
      %s140 = sphi 0, %s124
      %s146 = sphi 0, %s148
      %s149 = sphi 0, %s146
      %s150 = sphi 0, %s149
      %s166 = sphi 0, %s150
      %s172 = sphi 0, %s174
      %s175 = sphi 0, %s172
      %s176 = sphi 0, %s175
      %s192 = sphi 0, %s176
      %s196 = sphi 0, %s196
      %s198 = sphi 0, %s196
      %s199 = sphi 0, %s198
      %s213 = sphi 0, %s199
    $region4: #{tpu_custom_call.1} parent=1 // loop_header_branch
      %19 = sbr.rel (%p17) target = $region8
    $region5: #{tpu_custom_call.1} parent=1 // loop_body
      %s21 = ssub.s32 %s16, 1
      %s22 = ssub.s32 %s16, 2
      %s23 = sadd.s32 %s16, 1
      %s25 = sadd.s32 %s24, 1
      %p28 = scmp.eq.s32.totalorder %s16, 1
      %p29 = scmp.ne.s32.totalorder %s24, %s26
      %p30 = scmp.eq.s32.totalorder %s16, 0
      %p31 = por %p29, %p30
      %p32 = scmp.ne.s32.totalorder %s24, %s26
      %p33 = scmp.eq.s32.totalorder %s21, 1
      %p34 = por %p32, %p33
      %p35 = scmp.ne.s32.totalorder %s26, %s27
      %p36 = scmp.eq.s32.totalorder %s21, 0
      %p37 = por %p35, %p36
      %p38 = scmp.ne.s32.totalorder %s26, %s27
      %p39 = scmp.eq.s32.totalorder %s22, 1
      %p40 = por %p38, %p39
      %p42 = scmp.ne.s32.totalorder %s27, %s41
      %p43 = scmp.eq.s32.totalorder %s22, 0
      %p44 = por %p42, %p43
      %s46 = sadd.s32 %s45, 1
      %p49 = scmp.eq.s32.totalorder %s16, 1
      %p50 = scmp.ne.s32.totalorder %s45, %s47
      %p51 = scmp.eq.s32.totalorder %s16, 0
      %p52 = por %p50, %p51
      %p53 = scmp.ne.s32.totalorder %s45, %s47
      %p54 = scmp.eq.s32.totalorder %s21, 1
      %p55 = por %p53, %p54
      %p56 = scmp.ne.s32.totalorder %s47, %s48
      %p57 = scmp.eq.s32.totalorder %s21, 0
      %p58 = por %p56, %p57
      %p59 = scmp.ne.s32.totalorder %s47, %s48
      %p60 = scmp.eq.s32.totalorder %s22, 1
      %p61 = por %p59, %p60
      %p63 = scmp.ne.s32.totalorder %s48, %s62
      %p64 = scmp.eq.s32.totalorder %s22, 0
      %p65 = por %p63, %p64
      %s66 = ssub.s32 %s16, %s23
      %p67 = scmp.eq.s32.totalorder %s66, 0
      %s69 = sadd.s32 %s68, 1
      %s70 = scalar_select %p67, %s68, %s69
      %p73 = pneg %p67
      %p74 = scmp.eq.s32.totalorder %s16, 1
      %p75 = por %p73, %p74
      %p76 = scmp.ne.s32.totalorder %s68, %s71
      %p77 = scmp.eq.s32.totalorder %s16, 0
      %p78 = por %p76, %p77
      %p79 = scmp.ne.s32.totalorder %s68, %s71
      %p80 = scmp.eq.s32.totalorder %s21, 1
      %p81 = por %p79, %p80
      %p82 = scmp.ne.s32.totalorder %s71, %s72
      %p83 = scmp.eq.s32.totalorder %s21, 0
      %p84 = por %p82, %p83
      %p85 = scmp.ne.s32.totalorder %s71, %s72
      %p86 = scmp.eq.s32.totalorder %s22, 1
      %p87 = por %p85, %p86
      %p89 = scmp.ne.s32.totalorder %s72, %s88
      %p90 = scmp.eq.s32.totalorder %s22, 0
      %p91 = por %p89, %p90
      %s92 = ssub.s32 %s16, %s23
      %p93 = scmp.eq.s32.totalorder %s92, 0
      %s95 = sadd.s32 %s94, 1
      %s96 = scalar_select %p93, %s94, %s95
      %p99 = pneg %p93
      %p100 = scmp.eq.s32.totalorder %s16, 1
      %p101 = por %p99, %p100
      %p102 = scmp.ne.s32.totalorder %s94, %s97
      %p103 = scmp.eq.s32.totalorder %s16, 0
      %p104 = por %p102, %p103
      %p105 = scmp.ne.s32.totalorder %s94, %s97
      %p106 = scmp.eq.s32.totalorder %s21, 1
      %p107 = por %p105, %p106
      %p108 = scmp.ne.s32.totalorder %s97, %s98
      %p109 = scmp.eq.s32.totalorder %s21, 0
      %p110 = por %p108, %p109
      %p111 = scmp.ne.s32.totalorder %s97, %s98
      %p112 = scmp.eq.s32.totalorder %s22, 1
      %p113 = por %p111, %p112
      %p115 = scmp.ne.s32.totalorder %s98, %s114
      %p116 = scmp.eq.s32.totalorder %s22, 0
      %p117 = por %p115, %p116
      %s118 = ssub.s32 %s16, %s23
      %p119 = scmp.eq.s32.totalorder %s118, 0
      %s121 = sadd.s32 %s120, 1
      %s122 = scalar_select %p119, %s120, %s121
      %p125 = pneg %p119
      %p126 = scmp.eq.s32.totalorder %s16, 1
      %p127 = por %p125, %p126
      %p128 = scmp.ne.s32.totalorder %s120, %s123
      %p129 = scmp.eq.s32.totalorder %s16, 0
      %p130 = por %p128, %p129
      %p131 = scmp.ne.s32.totalorder %s120, %s123
      %p132 = scmp.eq.s32.totalorder %s21, 1
      %p133 = por %p131, %p132
      %p134 = scmp.ne.s32.totalorder %s123, %s124
      %p135 = scmp.eq.s32.totalorder %s21, 0
      %p136 = por %p134, %p135
      %p137 = scmp.ne.s32.totalorder %s123, %s124
      %p138 = scmp.eq.s32.totalorder %s22, 1
      %p139 = por %p137, %p138
      %p141 = scmp.ne.s32.totalorder %s124, %s140
      %p142 = scmp.eq.s32.totalorder %s22, 0
      %p143 = por %p141, %p142
      %s144 = ssub.s32 %s16, %s23
      %p145 = scmp.eq.s32.totalorder %s144, 0
      %s147 = sadd.s32 %s146, 1
      %s148 = scalar_select %p145, %s146, %s147
      %p151 = pneg %p145
      %p152 = scmp.eq.s32.totalorder %s16, 1
      %p153 = por %p151, %p152
      %p154 = scmp.ne.s32.totalorder %s146, %s149
      %p155 = scmp.eq.s32.totalorder %s16, 0
      %p156 = por %p154, %p155
      %p157 = scmp.ne.s32.totalorder %s146, %s149
      %p158 = scmp.eq.s32.totalorder %s21, 1
      %p159 = por %p157, %p158
      %p160 = scmp.ne.s32.totalorder %s149, %s150
      %p161 = scmp.eq.s32.totalorder %s21, 0
      %p162 = por %p160, %p161
      %p163 = scmp.ne.s32.totalorder %s149, %s150
      %p164 = scmp.eq.s32.totalorder %s22, 1
      %p165 = por %p163, %p164
      %p167 = scmp.ne.s32.totalorder %s150, %s166
      %p168 = scmp.eq.s32.totalorder %s22, 0
      %p169 = por %p167, %p168
      %s170 = ssub.s32 %s16, %s23
      %p171 = scmp.eq.s32.totalorder %s170, 0
      %s173 = sadd.s32 %s172, 1
      %s174 = scalar_select %p171, %s172, %s173
      %p177 = pneg %p171
      %p178 = scmp.eq.s32.totalorder %s16, 1
      %p179 = por %p177, %p178
      %p180 = scmp.ne.s32.totalorder %s172, %s175
      %p181 = scmp.eq.s32.totalorder %s16, 0
      %p182 = por %p180, %p181
      %p183 = scmp.ne.s32.totalorder %s172, %s175
      %p184 = scmp.eq.s32.totalorder %s21, 1
      %p185 = por %p183, %p184
      %p186 = scmp.ne.s32.totalorder %s175, %s176
      %p187 = scmp.eq.s32.totalorder %s21, 0
      %p188 = por %p186, %p187
      %p189 = scmp.ne.s32.totalorder %s175, %s176
      %p190 = scmp.eq.s32.totalorder %s22, 1
      %p191 = por %p189, %p190
      %p193 = scmp.ne.s32.totalorder %s176, %s192
      %p194 = scmp.eq.s32.totalorder %s22, 0
      %p195 = por %p193, %p194
      %s197 = sadd.s32 %s196, 1
      %p200 = scmp.eq.s32.totalorder %s16, 1
      %p201 = scmp.ne.s32.totalorder %s196, %s198
      %p202 = scmp.eq.s32.totalorder %s16, 0
      %p203 = por %p201, %p202
      %p204 = scmp.ne.s32.totalorder %s196, %s198
      %p205 = scmp.eq.s32.totalorder %s21, 1
      %p206 = por %p204, %p205
      %p207 = scmp.ne.s32.totalorder %s198, %s199
      %p208 = scmp.eq.s32.totalorder %s21, 0
      %p209 = por %p207, %p208
      %p210 = scmp.ne.s32.totalorder %s198, %s199
      %p211 = scmp.eq.s32.totalorder %s22, 1
      %p212 = por %p210, %p211
      %p214 = scmp.ne.s32.totalorder %s199, %s213
      %p215 = scmp.eq.s32.totalorder %s22, 0
      %p216 = por %p214, %p215
      %p217 = scmp.le.s32.totalorder 1, %s16
      %p218 = scmp.lt.s32.totalorder %s16, 3
      %p219 = pnand %p217, %p218
      %p220 = pneg %p219
      // Predicated region
      $region9: #{tpu_custom_call.1} parent=5 // pred_check
        _
      $region10: #{tpu_custom_call.1} parent=5 // pred_check_branch
        %222 = sbr.rel (%p219) target = $region12
      $region11: #{tpu_custom_call.1} parent=5 // pred_region
        %s223 = ssub.s32 %s16, 1
        // Predicated region
        $region13: #{tpu_custom_call.1} parent=11 // pred_check
          %p224 = pneg %p37
        $region14: #{tpu_custom_call.1} parent=11 // pred_check_branch
          %226 = sbr.rel (%p224) target = $region16
        $region15: #{tpu_custom_call.1} parent=11 // pred_region
          %s228 = ssub.s32 256, 256
          %229 = vsyncadd [#allocation3], %s228
          %s230 = sshll.u32 [#allocation2], 4
          %s231 = int_to_ptr.vmem [resolvable:$true] %s230
          %236 = dma.hbm_to_vmem [thread:$0]  %s0, 256, %s231, [#allocation3], 128, 128, 8
        $region16: #{tpu_custom_call.1} parent=11 // pred_fallthru
          _
        // Predicated region
        $region17: #{tpu_custom_call.1} parent=11 // pred_check
          %p237 = pneg %p58
        $region18: #{tpu_custom_call.1} parent=11 // pred_check_branch
          %239 = sbr.rel (%p237) target = $region20
        $region19: #{tpu_custom_call.1} parent=11 // pred_region
          %s241 = ssub.s32 128, 128
          %242 = vsyncadd [#allocation6], %s241
          %s244 = sshll.u32 [#allocation5], 4
          %s245 = int_to_ptr.vmem [resolvable:$true] %s244
          %247 = dma.hbm_to_vmem [thread:$0]  %s1, 128, %s245, [#allocation6]
        $region20: #{tpu_custom_call.1} parent=11 // pred_fallthru
          _
      $region12: #{tpu_custom_call.1} parent=5 // pred_fallthru
        _
      %p248 = scmp.lt.s32.totalorder %s16, 2
      // Predicated region
      $region21: #{tpu_custom_call.1} parent=5 // pred_check
        %p249 = pneg %p248
      $region22: #{tpu_custom_call.1} parent=5 // pred_check_branch
        %251 = sbr.rel (%p249) target = $region24
      $region23: #{tpu_custom_call.1} parent=5 // pred_region
        // Predicated region
        $region25: #{tpu_custom_call.1} parent=23 // pred_check
          %p252 = pneg %p78
        $region26: #{tpu_custom_call.1} parent=23 // pred_check_branch
          %254 = sbr.rel (%p252) target = $region28
        $region27: #{tpu_custom_call.1} parent=23 // pred_region
          %p255 = scmp.lt.s32.totalorder %s16, 1
          %s256 = scalar_select %p255, %s16, 1
          %s257 = smul.addr %s256, 4
          %s258 = smul.addr %s257, 4
          %s259 = scalar_lea.vmem %s2, %s258
        $region28: #{tpu_custom_call.1} parent=23 // pred_fallthru
          _
        // Predicated region
        $region29: #{tpu_custom_call.1} parent=23 // pred_check
          %p260 = pneg %p104
        $region30: #{tpu_custom_call.1} parent=23 // pred_check_branch
          %262 = sbr.rel (%p260) target = $region32
        $region31: #{tpu_custom_call.1} parent=23 // pred_region
          %p263 = scmp.lt.s32.totalorder %s16, 1
          %s264 = scalar_select %p263, %s16, 1
          %s265 = smul.addr %s264, 4
          %s266 = smul.addr %s265, 4
          %s267 = scalar_lea.vmem %s3, %s266
        $region32: #{tpu_custom_call.1} parent=23 // pred_fallthru
          _
        // Predicated region
        $region33: #{tpu_custom_call.1} parent=23 // pred_check
          %p268 = pneg %p130
        $region34: #{tpu_custom_call.1} parent=23 // pred_check_branch
          %270 = sbr.rel (%p268) target = $region36
        $region35: #{tpu_custom_call.1} parent=23 // pred_region
          %p271 = scmp.lt.s32.totalorder %s16, 1
          %s272 = scalar_select %p271, %s16, 1
          %s273 = smul.addr %s272, 4
          %s274 = smul.addr %s273, 4
          %s275 = scalar_lea.vmem %s4, %s274
        $region36: #{tpu_custom_call.1} parent=23 // pred_fallthru
          _
        // Predicated region
        $region37: #{tpu_custom_call.1} parent=23 // pred_check
          %p276 = pneg %p156
        $region38: #{tpu_custom_call.1} parent=23 // pred_check_branch
          %278 = sbr.rel (%p276) target = $region40
        $region39: #{tpu_custom_call.1} parent=23 // pred_region
          %p279 = scmp.lt.s32.totalorder %s16, 1
          %s280 = scalar_select %p279, %s16, 1
          %s281 = smul.addr %s280, 8
          %s282 = smul.addr %s281, 4
          %s283 = scalar_lea.vmem %s5, %s282
        $region40: #{tpu_custom_call.1} parent=23 // pred_fallthru
          _
        // Predicated region
        $region41: #{tpu_custom_call.1} parent=23 // pred_check
          %p284 = pneg %p182
        $region42: #{tpu_custom_call.1} parent=23 // pred_check_branch
          %286 = sbr.rel (%p284) target = $region44
        $region43: #{tpu_custom_call.1} parent=23 // pred_region
          %p287 = scmp.lt.s32.totalorder %s16, 1
          %s288 = scalar_select %p287, %s16, 1
          %s289 = smul.addr %s288, 8
          %s290 = scalar_lea.vmem %s6, %s289
        $region44: #{tpu_custom_call.1} parent=23 // pred_fallthru
          _
      $region24: #{tpu_custom_call.1} parent=5 // pred_fallthru
        _
      %p291 = scmp.le.s32.totalorder 1, %s16
      %p292 = scmp.lt.s32.totalorder %s16, 3
      %p293 = pnand %p291, %p292
      %p294 = pneg %p293
      // Predicated region
      $region45: #{tpu_custom_call.1} parent=5 // pred_check
        _
      $region46: #{tpu_custom_call.1} parent=5 // pred_check_branch
        %296 = sbr.rel (%p293) target = $region48
      $region47: #{tpu_custom_call.1} parent=5 // pred_region
        %s297 = ssub.s32 %s16, 1
        // Predicated region
        $region49: #{tpu_custom_call.1} parent=47 // pred_check
          %p298 = pneg %p37
        $region50: #{tpu_custom_call.1} parent=47 // pred_check_branch
          %300 = sbr.rel (%p298) target = $region52
        $region51: #{tpu_custom_call.1} parent=47 // pred_region
          %301 = dma.done [#allocation3], 256
        $region52: #{tpu_custom_call.1} parent=47 // pred_fallthru
          _
        // Predicated region
        $region53: #{tpu_custom_call.1} parent=47 // pred_check
          %p302 = pneg %p58
        $region54: #{tpu_custom_call.1} parent=47 // pred_check_branch
          %304 = sbr.rel (%p302) target = $region56
        $region55: #{tpu_custom_call.1} parent=47 // pred_region
          %305 = dma.done [#allocation6], 128
        $region56: #{tpu_custom_call.1} parent=47 // pred_fallthru
          _
        %p306 = pneg %p37
        %p307 = pneg %p34
        %p308 = pneg %p58
        %p309 = pneg %p55
        %p310 = scmp.lt.s32.totalorder %s21, 1
        %s311 = scalar_select %p310, %s21, 1
        %s312 = smul.addr %s311, 4
        %s313 = smul.addr %s312, 4
        %s314 = scalar_lea.vmem %s2, %s313
        %p315 = pneg %p84
        %p316 = pneg %p81
        %p317 = scmp.lt.s32.totalorder %s21, 1
        %s318 = scalar_select %p317, %s21, 1
        %s319 = smul.addr %s318, 4
        %s320 = smul.addr %s319, 4
        %s321 = scalar_lea.vmem %s3, %s320
        %p322 = pneg %p110
        %p323 = pneg %p107
        %p324 = scmp.lt.s32.totalorder %s21, 1
        %s325 = scalar_select %p324, %s21, 1
        %s326 = smul.addr %s325, 4
        %s327 = smul.addr %s326, 4
        %s328 = scalar_lea.vmem %s4, %s327
        %p329 = pneg %p136
        %p330 = pneg %p133
        %p331 = scmp.lt.s32.totalorder %s21, 1
        %s332 = scalar_select %p331, %s21, 1
        %s333 = smul.addr %s332, 8
        %s334 = smul.addr %s333, 4
        %s335 = scalar_lea.vmem %s5, %s334
        %p336 = pneg %p162
        %p337 = pneg %p159
        %p338 = scmp.lt.s32.totalorder %s21, 1
        %s339 = scalar_select %p338, %s21, 1
        %s340 = smul.addr %s339, 8
        %s341 = scalar_lea.vmem %s6, %s340
        %p342 = pneg %p188
        %p343 = pneg %p185
        %p344 = pneg %p209
        %p345 = pneg %p206
        %p346 = scmp.lt.s32.totalorder %s21, 1
        %s347 = scalar_select %p346, %s21, 1
        %s348 = smul.addr %s347, 4
        %s349 = smul.addr %s348, 4
        %s350 = scalar_lea.vmem %s2, %s349
        %p351 = scmp.lt.s32.totalorder %s21, 1
        %s352 = scalar_select %p351, %s21, 1
        %s353 = smul.addr %s352, 4
        %s354 = smul.addr %s353, 4
        %s355 = scalar_lea.vmem %s3, %s354
        %p356 = scmp.lt.s32.totalorder %s21, 1
        %s357 = scalar_select %p356, %s21, 1
        %s358 = smul.addr %s357, 4
        %s359 = smul.addr %s358, 4
        %s360 = scalar_lea.vmem %s4, %s359
        %p361 = scmp.lt.s32.totalorder %s21, 1
        %s362 = scalar_select %p361, %s21, 1
        %s363 = smul.addr %s362, 8
        %s364 = smul.addr %s363, 4
        %s365 = scalar_lea.vmem %s5, %s364
        %p366 = scmp.lt.s32.totalorder %s21, 1
        %s367 = scalar_select %p366, %s21, 1
        %s368 = smul.addr %s367, 8
        %s369 = scalar_lea.vmem %s6, %s368
        %p371 = scmp.eq.s32.totalorder %s21, 0
        // Predicated region
        $region57: #{tpu_custom_call.1} parent=47 // pred_check
          %p372 = pneg %p371
        $region58: #{tpu_custom_call.1} parent=47 // pred_check_branch
          %374 = sbr.rel (%p372) target = $region60
        $region59: #{tpu_custom_call.1} parent=47 // pred_region
          %v375 = vld [vmem:[#allocation2] sm:$0xff]
          %v376 = vld [vmem:[#allocation2 + $0x8] sm:$0xff]
          %vm377 = vcmask 261120
          %378 = vst.msk [vmem:[#allocation7] sm:$0xff] %vm377, %v375
          %379 = vst.msk [vmem:[#allocation7 + $0x8] sm:$0xff] %vm377, %v376
        $region60: #{tpu_custom_call.1} parent=47 // pred_fallthru
          _
        %v380 = vld [vmem:[#allocation7] sm:$0xff]
        %v381 = vld [vmem:[#allocation7 + $0x8] sm:$0xff]
        %p382 = scmp.gt.s32.totalorder %s21, 0
        %s383 = scalar_select %p382, 1.0, 0.0
        %v384 = vld [vmem:[#allocation5] sm:$0xff]
        %v385 = vstv %s383
        %v386 = vmul.f32 %v384, %v385
        %v387 = vadd.f32 %v380, %v386
        %v388 = vadd.f32 %v381, %v386
        %v389 = vld [vmem:[%s369] sm:$0xff]
        %vm390 = vcmask 261120
        %v391 = vsel %vm390, %v387, 0.0
        %392 = vadd.xlane.f32.xlu0 %v391
        %v393 = vpop.xlane.xlu0 %392
        %v394 = vsel %vm390, %v388, 0.0
        %395 = vadd.xlane.f32.xlu0 %v394
        %v396 = vpop.xlane.xlu0 %395
        %v397 = vrcp.pop 32.0
        %v398 = vmul.f32 %v393, %v397
        %v399 = vmul.f32 %v396, %v397
        %v400 = vsub.f32 %v387, %v398
        %v401 = vsub.f32 %v388, %v399
        %v402 = vmul.f32 %v400, %v400
        %v403 = vmul.f32 %v401, %v401
        %v404 = vsel %vm390, %v402, 0.0
        %405 = vadd.xlane.f32.xlu0 %v404
        %v406 = vpop.xlane.xlu0 %405
        %v407 = vsel %vm390, %v403, 0.0
        %408 = vadd.xlane.f32.xlu0 %v407
        %v409 = vpop.xlane.xlu0 %408
        %v410 = vmul.f32 %v406, %v397
        %v411 = vmul.f32 %v409, %v397
        %v412 = vadd.f32 %v410, 1e-05
        %v413 = vadd.f32 %v411, 1e-05
        %v414 = vrsqrt.pop %v412
        %v415 = vrsqrt.pop %v413
        %v416 = vmul.f32 %v400, %v414
        %v417 = vmul.f32 %v401, %v415
        %v418 = vlaneseq
        %v419 = vshrl.u32 %v418, 7
        %v420 = vsub.s32 0, %v419
        %v421 = vrot.slane %v389, %v420
        %v422 = vmul.f32 %v416, %v421
        %v423 = vmul.f32 %v417, %v421
        %v424 = vlaneseq
        %v425 = vshrl.u32 %v424, 7
        %v426 = vsub.s32 1, %v425
        %v427 = vrot.slane %v389, %v426
        %v428 = vadd.f32 %v422, %v427
        %v429 = vadd.f32 %v423, %v427
        %v430 = vpack.c.bf16 %v429, %v428
        %v431 = vld [vmem:[%s350] sm:$0xf]
        %v432 = vld [vmem:[%s350 + $0x4] sm:$0xf]
        %v433 = vld [vmem:[%s350 + $0x8] sm:$0xf]
        %v434 = vld [vmem:[%s350 + $0xc] sm:$0xf]
        %v435 = vlaneseq
        %v436 = vshrl.u32 %v435, 7
        %v437 = vsub.s32 4, %v436
        %v438 = vrot.slane %v389, %v437
        %v443 = vunpack.c.l.b16 %v431
        %v444 = vunpack.c.l.b16 %v432
        %v445 = vunpack.c.l.b16 %v433
        %v446 = vunpack.c.l.b16 %v434
        %v447 = vpack.c.b16 %v444, %v443
        %v448 = vpack.c.b16 %v446, %v445
        %v452 = vsel %vm390, %v430, 0
        %454 = vmatprep.subr.bf16.mxu0 0
        %455 = vmatpush1.bf16.msra.mxu0 %v447
        %456 = vmatprep.subr.bf16.mxu0 0
        %457 = vmatpush1.bf16.msra.mxu0 %v448
        %458 = vmatprep.subr.bf16.mxu0 0
        %459 = vmatpush1.bf16.msra.mxu0 0
        %460 = vmatprep.subr.bf16.mxu0 0
        %461 = vmatpush1.bf16.msra.mxu0 0
        %462 = vmatprep.subr.bf16.mxu0 0
        %463 = vmatpush1.bf16.msra.mxu0 0
        %464 = vmatprep.subr.bf16.mxu0 0
        %465 = vmatpush1.bf16.msra.mxu0 0
        %466 = vmatprep.subr.bf16.mxu0 0
        %467 = vmatpush1.bf16.msra.mxu0 0
        %468 = vmatprep.subr.bf16.mxu0 0
        %469 = vmatpush1.bf16.msra.mxu0 0
        %470 = vmatprep.subr.bf16.mxu0 0
        %471 = vmatpush1.bf16.msra.mxu0 0
        %472 = vmatprep.subr.bf16.mxu0 0
        %473 = vmatpush1.bf16.msra.mxu0 0
        %474 = vmatprep.subr.bf16.mxu0 0
        %475 = vmatpush1.bf16.msra.mxu0 0
        %476 = vmatprep.subr.bf16.mxu0 0
        %477 = vmatpush1.bf16.msra.mxu0 0
        %478 = vmatprep.subr.bf16.mxu0 0
        %479 = vmatpush1.bf16.msra.mxu0 0
        %480 = vmatprep.subr.bf16.mxu0 0
        %481 = vmatpush1.bf16.msra.mxu0 0
        %482 = vmatprep.subr.bf16.mxu0 0
        %483 = vmatpush1.bf16.msra.mxu0 0
        %484 = vmatprep.subr.bf16.mxu0 0
        %485 = vmatpush1.bf16.msra.mxu0 0
        %486 = vmatprep.mubr.bf16.mxu0 0
        %487 = vmatmul.mubr.bf16.gmra.mrb[0].mxu0 %v452
        %v488 = vpop.f32.mrb[0].mxu0
        %v489 = vadd.f32 %v438, %v488
        %v490 = vpop.f32.mrb[0].mxu0
        %v491 = vpop.f32.mrb[0].mxu0
        %v492 = vadd.f32 %v438, %v491
        %v493 = vpop.f32.mrb[0].mxu0
        %494 = vdwg.mxu0
        %v495 = vmul.f32 %v489, 0.17677669
        %v496 = vmul.f32 %v492, 0.17677669
        %498 = vrot.lane.b32.xlu0 %v495, 120
        %v499 = vpop.permute.xlu0 %498
        %500 = vrot.lane.b32.xlu0 %v495, 112
        %v501 = vpop.permute.xlu0 %500
        %502 = vrot.lane.b32.xlu0 %v495, 104
        %v503 = vpop.permute.xlu0 %502
        %505 = vrot.lane.b32.xlu0 %v496, 120
        %v506 = vpop.permute.xlu0 %505
        %507 = vrot.lane.b32.xlu0 %v496, 112
        %v508 = vpop.permute.xlu0 %507
        %509 = vrot.lane.b32.xlu0 %v496, 104
        %v510 = vpop.permute.xlu0 %509
        %512 = vrot.lane.b32.xlu0 %v489, 120
        %v513 = vpop.permute.xlu0 %512
        %514 = vrot.lane.b32.xlu0 %v489, 112
        %v515 = vpop.permute.xlu0 %514
        %516 = vrot.lane.b32.xlu0 %v489, 104
        %v517 = vpop.permute.xlu0 %516
        %519 = vrot.lane.b32.xlu0 %v492, 120
        %v520 = vpop.permute.xlu0 %519
        %521 = vrot.lane.b32.xlu0 %v492, 112
        %v522 = vpop.permute.xlu0 %521
        %523 = vrot.lane.b32.xlu0 %v492, 104
        %v524 = vpop.permute.xlu0 %523
        %525 = vrot.lane.b32.xlu0 %v489, 96
        %v526 = vpop.permute.xlu0 %525
        %vm527 = vcmask 64512
        %v528 = vsel %vm527, %v495, 0
        %v530 = vsel %vm527, %v526, 0
        %532 = vmatprep.subr.mxu0 0.0
        %533 = vmatpush1.xpose.msra.mxu0 %v530
        %534 = vmatprep.subr.mxu0 0.0
        %535 = vmatpush1.xpose.msra.mxu0 0.0
        %536 = vmatprep.subr.mxu0 0.0
        %537 = vmatpush1.xpose.msra.mxu0 0.0
        %538 = vmatprep.subr.mxu0 0.0
        %539 = vmatpush1.xpose.msra.mxu0 0.0
        %540 = vmatprep.subr.mxu0 0.0
        %541 = vmatpush1.xpose.msra.mxu0 0.0
        %542 = vmatprep.subr.mxu0 0.0
        %543 = vmatpush1.xpose.msra.mxu0 0.0
        %544 = vmatprep.subr.mxu0 0.0
        %545 = vmatpush1.xpose.msra.mxu0 0.0
        %546 = vmatprep.subr.mxu0 0.0
        %547 = vmatpush1.xpose.msra.mxu0 0.0
        %548 = vmatprep.subr.mxu0 0.0
        %549 = vmatpush1.xpose.msra.mxu0 0.0
        %550 = vmatprep.subr.mxu0 0.0
        %551 = vmatpush1.xpose.msra.mxu0 0.0
        %552 = vmatprep.subr.mxu0 0.0
        %553 = vmatpush1.xpose.msra.mxu0 0.0
        %554 = vmatprep.subr.mxu0 0.0
        %555 = vmatpush1.xpose.msra.mxu0 0.0
        %556 = vmatprep.subr.mxu0 0.0
        %557 = vmatpush1.xpose.msra.mxu0 0.0
        %558 = vmatprep.subr.mxu0 0.0
        %559 = vmatpush1.xpose.msra.mxu0 0.0
        %560 = vmatprep.subr.mxu0 0.0
        %561 = vmatpush1.xpose.msra.mxu0 0.0
        %562 = vmatprep.subr.mxu0 0.0
        %563 = vmatpush1.xpose.msra.mxu0 0.0
        %564 = vmatprep.subr.mxu0 0.0
        %565 = vmatpush1.xpose.msra.mxu0 0.0
        %566 = vmatprep.subr.mxu0 0.0
        %567 = vmatpush1.xpose.msra.mxu0 0.0
        %568 = vmatprep.subr.mxu0 0.0
        %569 = vmatpush1.xpose.msra.mxu0 0.0
        %570 = vmatprep.subr.mxu0 0.0
        %571 = vmatpush1.xpose.msra.mxu0 0.0
        %572 = vmatprep.subr.mxu0 0.0
        %573 = vmatpush1.xpose.msra.mxu0 0.0
        %574 = vmatprep.subr.mxu0 0.0
        %575 = vmatpush1.xpose.msra.mxu0 0.0
        %576 = vmatprep.subr.mxu0 0.0
        %577 = vmatpush1.xpose.msra.mxu0 0.0
        %578 = vmatprep.subr.mxu0 0.0
        %579 = vmatpush1.xpose.msra.mxu0 0.0
        %580 = vmatprep.subr.mxu0 0.0
        %581 = vmatpush1.xpose.msra.mxu0 0.0
        %582 = vmatprep.subr.mxu0 0.0
        %583 = vmatpush1.xpose.msra.mxu0 0.0
        %584 = vmatprep.subr.mxu0 0.0
        %585 = vmatpush1.xpose.msra.mxu0 0.0
        %586 = vmatprep.subr.mxu0 0.0
        %587 = vmatpush1.xpose.msra.mxu0 0.0
        %588 = vmatprep.subr.mxu0 0.0
        %589 = vmatpush1.xpose.msra.mxu0 0.0
        %590 = vmatprep.subr.mxu0 0.0
        %591 = vmatpush1.xpose.msra.mxu0 0.0
        %592 = vmatprep.subr.mxu0 0.0
        %593 = vmatpush1.xpose.msra.mxu0 0.0
        %594 = vmatprep.subr.mxu0 0.0
        %595 = vmatpush1.xpose.msra.mxu0 0.0
        %596 = vmatprep.mubr.f32.mxu0 0.0
        %597 = vmatmul.mubr.f32.gmra.mrb[0].mxu0 %v528
        %v598 = vpop.f32.mrb[0].mxu0
        %v599 = vadd.f32 0.0, %v598
        %v600 = vpop.f32.mrb[0].mxu0
        %601 = vdwg.mxu0
        %602 = vrot.lane.b32.xlu0 %v513, 96
        %v603 = vpop.permute.xlu0 %602
        %v604 = vsel %vm527, %v499, 0
        %v606 = vsel %vm527, %v603, 0
        %608 = vmatprep.subr.mxu0 0.0
        %609 = vmatpush1.xpose.msra.mxu0 %v606
        %610 = vmatprep.subr.mxu0 0.0
        %611 = vmatpush1.xpose.msra.mxu0 0.0
        %612 = vmatprep.subr.mxu0 0.0
        %613 = vmatpush1.xpose.msra.mxu0 0.0
        %614 = vmatprep.subr.mxu0 0.0
        %615 = vmatpush1.xpose.msra.mxu0 0.0
        %616 = vmatprep.subr.mxu0 0.0
        %617 = vmatpush1.xpose.msra.mxu0 0.0
        %618 = vmatprep.subr.mxu0 0.0
        %619 = vmatpush1.xpose.msra.mxu0 0.0
        %620 = vmatprep.subr.mxu0 0.0
        %621 = vmatpush1.xpose.msra.mxu0 0.0
        %622 = vmatprep.subr.mxu0 0.0
        %623 = vmatpush1.xpose.msra.mxu0 0.0
        %624 = vmatprep.subr.mxu0 0.0
        %625 = vmatpush1.xpose.msra.mxu0 0.0
        %626 = vmatprep.subr.mxu0 0.0
        %627 = vmatpush1.xpose.msra.mxu0 0.0
        %628 = vmatprep.subr.mxu0 0.0
        %629 = vmatpush1.xpose.msra.mxu0 0.0
        %630 = vmatprep.subr.mxu0 0.0
        %631 = vmatpush1.xpose.msra.mxu0 0.0
        %632 = vmatprep.subr.mxu0 0.0
        %633 = vmatpush1.xpose.msra.mxu0 0.0
        %634 = vmatprep.subr.mxu0 0.0
        %635 = vmatpush1.xpose.msra.mxu0 0.0
        %636 = vmatprep.subr.mxu0 0.0
        %637 = vmatpush1.xpose.msra.mxu0 0.0
        %638 = vmatprep.subr.mxu0 0.0
        %639 = vmatpush1.xpose.msra.mxu0 0.0
        %640 = vmatprep.subr.mxu0 0.0
        %641 = vmatpush1.xpose.msra.mxu0 0.0
        %642 = vmatprep.subr.mxu0 0.0
        %643 = vmatpush1.xpose.msra.mxu0 0.0
        %644 = vmatprep.subr.mxu0 0.0
        %645 = vmatpush1.xpose.msra.mxu0 0.0
        %646 = vmatprep.subr.mxu0 0.0
        %647 = vmatpush1.xpose.msra.mxu0 0.0
        %648 = vmatprep.subr.mxu0 0.0
        %649 = vmatpush1.xpose.msra.mxu0 0.0
        %650 = vmatprep.subr.mxu0 0.0
        %651 = vmatpush1.xpose.msra.mxu0 0.0
        %652 = vmatprep.subr.mxu0 0.0
        %653 = vmatpush1.xpose.msra.mxu0 0.0
        %654 = vmatprep.subr.mxu0 0.0
        %655 = vmatpush1.xpose.msra.mxu0 0.0
        %656 = vmatprep.subr.mxu0 0.0
        %657 = vmatpush1.xpose.msra.mxu0 0.0
        %658 = vmatprep.subr.mxu0 0.0
        %659 = vmatpush1.xpose.msra.mxu0 0.0
        %660 = vmatprep.subr.mxu0 0.0
        %661 = vmatpush1.xpose.msra.mxu0 0.0
        %662 = vmatprep.subr.mxu0 0.0
        %663 = vmatpush1.xpose.msra.mxu0 0.0
        %664 = vmatprep.subr.mxu0 0.0
        %665 = vmatpush1.xpose.msra.mxu0 0.0
        %666 = vmatprep.subr.mxu0 0.0
        %667 = vmatpush1.xpose.msra.mxu0 0.0
        %668 = vmatprep.subr.mxu0 0.0
        %669 = vmatpush1.xpose.msra.mxu0 0.0
        %670 = vmatprep.subr.mxu0 0.0
        %671 = vmatpush1.xpose.msra.mxu0 0.0
        %672 = vmatprep.mubr.f32.mxu0 0.0
        %673 = vmatmul.mubr.f32.gmra.mrb[0].mxu0 %v604
        %v674 = vpop.f32.mrb[0].mxu0
        %v675 = vadd.f32 0.0, %v674
        %v676 = vpop.f32.mrb[0].mxu0
        %677 = vdwg.mxu0
        %678 = vrot.lane.b32.xlu0 %v515, 96
        %v679 = vpop.permute.xlu0 %678
        %v680 = vsel %vm527, %v501, 0
        %v682 = vsel %vm527, %v679, 0
        %684 = vmatprep.subr.mxu0 0.0
        %685 = vmatpush1.xpose.msra.mxu0 %v682
        %686 = vmatprep.subr.mxu0 0.0
        %687 = vmatpush1.xpose.msra.mxu0 0.0
        %688 = vmatprep.subr.mxu0 0.0
        %689 = vmatpush1.xpose.msra.mxu0 0.0
        %690 = vmatprep.subr.mxu0 0.0
        %691 = vmatpush1.xpose.msra.mxu0 0.0
        %692 = vmatprep.subr.mxu0 0.0
        %693 = vmatpush1.xpose.msra.mxu0 0.0
        %694 = vmatprep.subr.mxu0 0.0
        %695 = vmatpush1.xpose.msra.mxu0 0.0
        %696 = vmatprep.subr.mxu0 0.0
        %697 = vmatpush1.xpose.msra.mxu0 0.0
        %698 = vmatprep.subr.mxu0 0.0
        %699 = vmatpush1.xpose.msra.mxu0 0.0
        %700 = vmatprep.subr.mxu0 0.0
        %701 = vmatpush1.xpose.msra.mxu0 0.0
        %702 = vmatprep.subr.mxu0 0.0
        %703 = vmatpush1.xpose.msra.mxu0 0.0
        %704 = vmatprep.subr.mxu0 0.0
        %705 = vmatpush1.xpose.msra.mxu0 0.0
        %706 = vmatprep.subr.mxu0 0.0
        %707 = vmatpush1.xpose.msra.mxu0 0.0
        %708 = vmatprep.subr.mxu0 0.0
        %709 = vmatpush1.xpose.msra.mxu0 0.0
        %710 = vmatprep.subr.mxu0 0.0
        %711 = vmatpush1.xpose.msra.mxu0 0.0
        %712 = vmatprep.subr.mxu0 0.0
        %713 = vmatpush1.xpose.msra.mxu0 0.0
        %714 = vmatprep.subr.mxu0 0.0
        %715 = vmatpush1.xpose.msra.mxu0 0.0
        %716 = vmatprep.subr.mxu0 0.0
        %717 = vmatpush1.xpose.msra.mxu0 0.0
        %718 = vmatprep.subr.mxu0 0.0
        %719 = vmatpush1.xpose.msra.mxu0 0.0
        %720 = vmatprep.subr.mxu0 0.0
        %721 = vmatpush1.xpose.msra.mxu0 0.0
        %722 = vmatprep.subr.mxu0 0.0
        %723 = vmatpush1.xpose.msra.mxu0 0.0
        %724 = vmatprep.subr.mxu0 0.0
        %725 = vmatpush1.xpose.msra.mxu0 0.0
        %726 = vmatprep.subr.mxu0 0.0
        %727 = vmatpush1.xpose.msra.mxu0 0.0
        %728 = vmatprep.subr.mxu0 0.0
        %729 = vmatpush1.xpose.msra.mxu0 0.0
        %730 = vmatprep.subr.mxu0 0.0
        %731 = vmatpush1.xpose.msra.mxu0 0.0
        %732 = vmatprep.subr.mxu0 0.0
        %733 = vmatpush1.xpose.msra.mxu0 0.0
        %734 = vmatprep.subr.mxu0 0.0
        %735 = vmatpush1.xpose.msra.mxu0 0.0
        %736 = vmatprep.subr.mxu0 0.0
        %737 = vmatpush1.xpose.msra.mxu0 0.0
        %738 = vmatprep.subr.mxu0 0.0
        %739 = vmatpush1.xpose.msra.mxu0 0.0
        %740 = vmatprep.subr.mxu0 0.0
        %741 = vmatpush1.xpose.msra.mxu0 0.0
        %742 = vmatprep.subr.mxu0 0.0
        %743 = vmatpush1.xpose.msra.mxu0 0.0
        %744 = vmatprep.subr.mxu0 0.0
        %745 = vmatpush1.xpose.msra.mxu0 0.0
        %746 = vmatprep.subr.mxu0 0.0
        %747 = vmatpush1.xpose.msra.mxu0 0.0
        %748 = vmatprep.mubr.f32.mxu0 0.0
        %749 = vmatmul.mubr.f32.gmra.mrb[0].mxu0 %v680
        %v750 = vpop.f32.mrb[0].mxu0
        %v751 = vadd.f32 0.0, %v750
        %v752 = vpop.f32.mrb[0].mxu0
        %753 = vdwg.mxu0
        %754 = vrot.lane.b32.xlu0 %v517, 96
        %v755 = vpop.permute.xlu0 %754
        %v756 = vsel %vm527, %v503, 0
        %v758 = vsel %vm527, %v755, 0
        %760 = vmatprep.subr.mxu0 0.0
        %761 = vmatpush1.xpose.msra.mxu0 %v758
        %762 = vmatprep.subr.mxu0 0.0
        %763 = vmatpush1.xpose.msra.mxu0 0.0
        %764 = vmatprep.subr.mxu0 0.0
        %765 = vmatpush1.xpose.msra.mxu0 0.0
        %766 = vmatprep.subr.mxu0 0.0
        %767 = vmatpush1.xpose.msra.mxu0 0.0
        %768 = vmatprep.subr.mxu0 0.0
        %769 = vmatpush1.xpose.msra.mxu0 0.0
        %770 = vmatprep.subr.mxu0 0.0
        %771 = vmatpush1.xpose.msra.mxu0 0.0
        %772 = vmatprep.subr.mxu0 0.0
        %773 = vmatpush1.xpose.msra.mxu0 0.0
        %774 = vmatprep.subr.mxu0 0.0
        %775 = vmatpush1.xpose.msra.mxu0 0.0
        %776 = vmatprep.subr.mxu0 0.0
        %777 = vmatpush1.xpose.msra.mxu0 0.0
        %778 = vmatprep.subr.mxu0 0.0
        %779 = vmatpush1.xpose.msra.mxu0 0.0
        %780 = vmatprep.subr.mxu0 0.0
        %781 = vmatpush1.xpose.msra.mxu0 0.0
        %782 = vmatprep.subr.mxu0 0.0
        %783 = vmatpush1.xpose.msra.mxu0 0.0
        %784 = vmatprep.subr.mxu0 0.0
        %785 = vmatpush1.xpose.msra.mxu0 0.0
        %786 = vmatprep.subr.mxu0 0.0
        %787 = vmatpush1.xpose.msra.mxu0 0.0
        %788 = vmatprep.subr.mxu0 0.0
        %789 = vmatpush1.xpose.msra.mxu0 0.0
        %790 = vmatprep.subr.mxu0 0.0
        %791 = vmatpush1.xpose.msra.mxu0 0.0
        %792 = vmatprep.subr.mxu0 0.0
        %793 = vmatpush1.xpose.msra.mxu0 0.0
        %794 = vmatprep.subr.mxu0 0.0
        %795 = vmatpush1.xpose.msra.mxu0 0.0
        %796 = vmatprep.subr.mxu0 0.0
        %797 = vmatpush1.xpose.msra.mxu0 0.0
        %798 = vmatprep.subr.mxu0 0.0
        %799 = vmatpush1.xpose.msra.mxu0 0.0
        %800 = vmatprep.subr.mxu0 0.0
        %801 = vmatpush1.xpose.msra.mxu0 0.0
        %802 = vmatprep.subr.mxu0 0.0
        %803 = vmatpush1.xpose.msra.mxu0 0.0
        %804 = vmatprep.subr.mxu0 0.0
        %805 = vmatpush1.xpose.msra.mxu0 0.0
        %806 = vmatprep.subr.mxu0 0.0
        %807 = vmatpush1.xpose.msra.mxu0 0.0
        %808 = vmatprep.subr.mxu0 0.0
        %809 = vmatpush1.xpose.msra.mxu0 0.0
        %810 = vmatprep.subr.mxu0 0.0
        %811 = vmatpush1.xpose.msra.mxu0 0.0
        %812 = vmatprep.subr.mxu0 0.0
        %813 = vmatpush1.xpose.msra.mxu0 0.0
        %814 = vmatprep.subr.mxu0 0.0
        %815 = vmatpush1.xpose.msra.mxu0 0.0
        %816 = vmatprep.subr.mxu0 0.0
        %817 = vmatpush1.xpose.msra.mxu0 0.0
        %818 = vmatprep.subr.mxu0 0.0
        %819 = vmatpush1.xpose.msra.mxu0 0.0
        %820 = vmatprep.subr.mxu0 0.0
        %821 = vmatpush1.xpose.msra.mxu0 0.0
        %822 = vmatprep.subr.mxu0 0.0
        %823 = vmatpush1.xpose.msra.mxu0 0.0
        %824 = vmatprep.mubr.f32.mxu0 0.0
        %825 = vmatmul.mubr.f32.gmra.mrb[0].mxu0 %v756
        %v826 = vpop.f32.mrb[0].mxu0
        %v827 = vadd.f32 0.0, %v826
        %v828 = vpop.f32.mrb[0].mxu0
        %829 = vdwg.mxu0
        %830 = vrot.lane.b32.xlu0 %v492, 96
        %v831 = vpop.permute.xlu0 %830
        %v832 = vsel %vm527, %v496, 0
        %v834 = vsel %vm527, %v831, 0
        %836 = vmatprep.subr.mxu0 0.0
        %837 = vmatpush1.xpose.msra.mxu0 %v834
        %838 = vmatprep.subr.mxu0 0.0
        %839 = vmatpush1.xpose.msra.mxu0 0.0
        %840 = vmatprep.subr.mxu0 0.0
        %841 = vmatpush1.xpose.msra.mxu0 0.0
        %842 = vmatprep.subr.mxu0 0.0
        %843 = vmatpush1.xpose.msra.mxu0 0.0
        %844 = vmatprep.subr.mxu0 0.0
        %845 = vmatpush1.xpose.msra.mxu0 0.0
        %846 = vmatprep.subr.mxu0 0.0
        %847 = vmatpush1.xpose.msra.mxu0 0.0
        %848 = vmatprep.subr.mxu0 0.0
        %849 = vmatpush1.xpose.msra.mxu0 0.0
        %850 = vmatprep.subr.mxu0 0.0
        %851 = vmatpush1.xpose.msra.mxu0 0.0
        %852 = vmatprep.subr.mxu0 0.0
        %853 = vmatpush1.xpose.msra.mxu0 0.0
        %854 = vmatprep.subr.mxu0 0.0
        %855 = vmatpush1.xpose.msra.mxu0 0.0
        %856 = vmatprep.subr.mxu0 0.0
        %857 = vmatpush1.xpose.msra.mxu0 0.0
        %858 = vmatprep.subr.mxu0 0.0
        %859 = vmatpush1.xpose.msra.mxu0 0.0
        %860 = vmatprep.subr.mxu0 0.0
        %861 = vmatpush1.xpose.msra.mxu0 0.0
        %862 = vmatprep.subr.mxu0 0.0
        %863 = vmatpush1.xpose.msra.mxu0 0.0
        %864 = vmatprep.subr.mxu0 0.0
        %865 = vmatpush1.xpose.msra.mxu0 0.0
        %866 = vmatprep.subr.mxu0 0.0
        %867 = vmatpush1.xpose.msra.mxu0 0.0
        %868 = vmatprep.subr.mxu0 0.0
        %869 = vmatpush1.xpose.msra.mxu0 0.0
        %870 = vmatprep.subr.mxu0 0.0
        %871 = vmatpush1.xpose.msra.mxu0 0.0
        %872 = vmatprep.subr.mxu0 0.0
        %873 = vmatpush1.xpose.msra.mxu0 0.0
        %874 = vmatprep.subr.mxu0 0.0
        %875 = vmatpush1.xpose.msra.mxu0 0.0
        %876 = vmatprep.subr.mxu0 0.0
        %877 = vmatpush1.xpose.msra.mxu0 0.0
        %878 = vmatprep.subr.mxu0 0.0
        %879 = vmatpush1.xpose.msra.mxu0 0.0
        %880 = vmatprep.subr.mxu0 0.0
        %881 = vmatpush1.xpose.msra.mxu0 0.0
        %882 = vmatprep.subr.mxu0 0.0
        %883 = vmatpush1.xpose.msra.mxu0 0.0
        %884 = vmatprep.subr.mxu0 0.0
        %885 = vmatpush1.xpose.msra.mxu0 0.0
        %886 = vmatprep.subr.mxu0 0.0
        %887 = vmatpush1.xpose.msra.mxu0 0.0
        %888 = vmatprep.subr.mxu0 0.0
        %889 = vmatpush1.xpose.msra.mxu0 0.0
        %890 = vmatprep.subr.mxu0 0.0
        %891 = vmatpush1.xpose.msra.mxu0 0.0
        %892 = vmatprep.subr.mxu0 0.0
        %893 = vmatpush1.xpose.msra.mxu0 0.0
        %894 = vmatprep.subr.mxu0 0.0
        %895 = vmatpush1.xpose.msra.mxu0 0.0
        %896 = vmatprep.subr.mxu0 0.0
        %897 = vmatpush1.xpose.msra.mxu0 0.0
        %898 = vmatprep.subr.mxu0 0.0
        %899 = vmatpush1.xpose.msra.mxu0 0.0
        %900 = vmatprep.mubr.f32.mxu0 0.0
        %901 = vmatmul.mubr.f32.gmra.mrb[0].mxu0 %v832
        %v902 = vpop.f32.mrb[0].mxu0
        %v903 = vadd.f32 0.0, %v902
        %v904 = vpop.f32.mrb[0].mxu0
        %905 = vdwg.mxu0
        %906 = vrot.lane.b32.xlu0 %v520, 96
        %v907 = vpop.permute.xlu0 %906
        %v908 = vsel %vm527, %v506, 0
        %v910 = vsel %vm527, %v907, 0
        %912 = vmatprep.subr.mxu0 0.0
        %913 = vmatpush1.xpose.msra.mxu0 %v910
        %914 = vmatprep.subr.mxu0 0.0
        %915 = vmatpush1.xpose.msra.mxu0 0.0
        %916 = vmatprep.subr.mxu0 0.0
        %917 = vmatpush1.xpose.msra.mxu0 0.0
        %918 = vmatprep.subr.mxu0 0.0
        %919 = vmatpush1.xpose.msra.mxu0 0.0
        %920 = vmatprep.subr.mxu0 0.0
        %921 = vmatpush1.xpose.msra.mxu0 0.0
        %922 = vmatprep.subr.mxu0 0.0
        %923 = vmatpush1.xpose.msra.mxu0 0.0
        %924 = vmatprep.subr.mxu0 0.0
        %925 = vmatpush1.xpose.msra.mxu0 0.0
        %926 = vmatprep.subr.mxu0 0.0
        %927 = vmatpush1.xpose.msra.mxu0 0.0
        %928 = vmatprep.subr.mxu0 0.0
        %929 = vmatpush1.xpose.msra.mxu0 0.0
        %930 = vmatprep.subr.mxu0 0.0
        %931 = vmatpush1.xpose.msra.mxu0 0.0
        %932 = vmatprep.subr.mxu0 0.0
        %933 = vmatpush1.xpose.msra.mxu0 0.0
        %934 = vmatprep.subr.mxu0 0.0
        %935 = vmatpush1.xpose.msra.mxu0 0.0
        %936 = vmatprep.subr.mxu0 0.0
        %937 = vmatpush1.xpose.msra.mxu0 0.0
        %938 = vmatprep.subr.mxu0 0.0
        %939 = vmatpush1.xpose.msra.mxu0 0.0
        %940 = vmatprep.subr.mxu0 0.0
        %941 = vmatpush1.xpose.msra.mxu0 0.0
        %942 = vmatprep.subr.mxu0 0.0
        %943 = vmatpush1.xpose.msra.mxu0 0.0
        %944 = vmatprep.subr.mxu0 0.0
        %945 = vmatpush1.xpose.msra.mxu0 0.0
        %946 = vmatprep.subr.mxu0 0.0
        %947 = vmatpush1.xpose.msra.mxu0 0.0
        %948 = vmatprep.subr.mxu0 0.0
        %949 = vmatpush1.xpose.msra.mxu0 0.0
        %950 = vmatprep.subr.mxu0 0.0
        %951 = vmatpush1.xpose.msra.mxu0 0.0
        %952 = vmatprep.subr.mxu0 0.0
        %953 = vmatpush1.xpose.msra.mxu0 0.0
        %954 = vmatprep.subr.mxu0 0.0
        %955 = vmatpush1.xpose.msra.mxu0 0.0
        %956 = vmatprep.subr.mxu0 0.0
        %957 = vmatpush1.xpose.msra.mxu0 0.0
        %958 = vmatprep.subr.mxu0 0.0
        %959 = vmatpush1.xpose.msra.mxu0 0.0
        %960 = vmatprep.subr.mxu0 0.0
        %961 = vmatpush1.xpose.msra.mxu0 0.0
        %962 = vmatprep.subr.mxu0 0.0
        %963 = vmatpush1.xpose.msra.mxu0 0.0
        %964 = vmatprep.subr.mxu0 0.0
        %965 = vmatpush1.xpose.msra.mxu0 0.0
        %966 = vmatprep.subr.mxu0 0.0
        %967 = vmatpush1.xpose.msra.mxu0 0.0
        %968 = vmatprep.subr.mxu0 0.0
        %969 = vmatpush1.xpose.msra.mxu0 0.0
        %970 = vmatprep.subr.mxu0 0.0
        %971 = vmatpush1.xpose.msra.mxu0 0.0
        %972 = vmatprep.subr.mxu0 0.0
        %973 = vmatpush1.xpose.msra.mxu0 0.0
        %974 = vmatprep.subr.mxu0 0.0
        %975 = vmatpush1.xpose.msra.mxu0 0.0
        %976 = vmatprep.mubr.f32.mxu0 0.0
        %977 = vmatmul.mubr.f32.gmra.mrb[0].mxu0 %v908
        %v978 = vpop.f32.mrb[0].mxu0
        %v979 = vadd.f32 0.0, %v978
        %v980 = vpop.f32.mrb[0].mxu0
        %981 = vdwg.mxu0
        %982 = vrot.lane.b32.xlu0 %v522, 96
        %v983 = vpop.permute.xlu0 %982
        %v984 = vsel %vm527, %v508, 0
        %v986 = vsel %vm527, %v983, 0
        %988 = vmatprep.subr.mxu0 0.0
        %989 = vmatpush1.xpose.msra.mxu0 %v986
        %990 = vmatprep.subr.mxu0 0.0
        %991 = vmatpush1.xpose.msra.mxu0 0.0
        %992 = vmatprep.subr.mxu0 0.0
        %993 = vmatpush1.xpose.msra.mxu0 0.0
        %994 = vmatprep.subr.mxu0 0.0
        %995 = vmatpush1.xpose.msra.mxu0 0.0
        %996 = vmatprep.subr.mxu0 0.0
        %997 = vmatpush1.xpose.msra.mxu0 0.0
        %998 = vmatprep.subr.mxu0 0.0
        %999 = vmatpush1.xpose.msra.mxu0 0.0
        %1000 = vmatprep.subr.mxu0 0.0
        %1001 = vmatpush1.xpose.msra.mxu0 0.0
        %1002 = vmatprep.subr.mxu0 0.0
        %1003 = vmatpush1.xpose.msra.mxu0 0.0
        %1004 = vmatprep.subr.mxu0 0.0
        %1005 = vmatpush1.xpose.msra.mxu0 0.0
        %1006 = vmatprep.subr.mxu0 0.0
        %1007 = vmatpush1.xpose.msra.mxu0 0.0
        %1008 = vmatprep.subr.mxu0 0.0
        %1009 = vmatpush1.xpose.msra.mxu0 0.0
        %1010 = vmatprep.subr.mxu0 0.0
        %1011 = vmatpush1.xpose.msra.mxu0 0.0
        %1012 = vmatprep.subr.mxu0 0.0
        %1013 = vmatpush1.xpose.msra.mxu0 0.0
        %1014 = vmatprep.subr.mxu0 0.0
        %1015 = vmatpush1.xpose.msra.mxu0 0.0
        %1016 = vmatprep.subr.mxu0 0.0
        %1017 = vmatpush1.xpose.msra.mxu0 0.0
        %1018 = vmatprep.subr.mxu0 0.0
        %1019 = vmatpush1.xpose.msra.mxu0 0.0
        %1020 = vmatprep.subr.mxu0 0.0
        %1021 = vmatpush1.xpose.msra.mxu0 0.0
        %1022 = vmatprep.subr.mxu0 0.0
        %1023 = vmatpush1.xpose.msra.mxu0 0.0
        %1024 = vmatprep.subr.mxu0 0.0
        %1025 = vmatpush1.xpose.msra.mxu0 0.0
        %1026 = vmatprep.subr.mxu0 0.0
        %1027 = vmatpush1.xpose.msra.mxu0 0.0
        %1028 = vmatprep.subr.mxu0 0.0
        %1029 = vmatpush1.xpose.msra.mxu0 0.0
        %1030 = vmatprep.subr.mxu0 0.0
        %1031 = vmatpush1.xpose.msra.mxu0 0.0
        %1032 = vmatprep.subr.mxu0 0.0
        %1033 = vmatpush1.xpose.msra.mxu0 0.0
        %1034 = vmatprep.subr.mxu0 0.0
        %1035 = vmatpush1.xpose.msra.mxu0 0.0
        %1036 = vmatprep.subr.mxu0 0.0
        %1037 = vmatpush1.xpose.msra.mxu0 0.0
        %1038 = vmatprep.subr.mxu0 0.0
        %1039 = vmatpush1.xpose.msra.mxu0 0.0
        %1040 = vmatprep.subr.mxu0 0.0
        %1041 = vmatpush1.xpose.msra.mxu0 0.0
        %1042 = vmatprep.subr.mxu0 0.0
        %1043 = vmatpush1.xpose.msra.mxu0 0.0
        %1044 = vmatprep.subr.mxu0 0.0
        %1045 = vmatpush1.xpose.msra.mxu0 0.0
        %1046 = vmatprep.subr.mxu0 0.0
        %1047 = vmatpush1.xpose.msra.mxu0 0.0
        %1048 = vmatprep.subr.mxu0 0.0
        %1049 = vmatpush1.xpose.msra.mxu0 0.0
        %1050 = vmatprep.subr.mxu0 0.0
        %1051 = vmatpush1.xpose.msra.mxu0 0.0
        %1052 = vmatprep.mubr.f32.mxu0 0.0
        %1053 = vmatmul.mubr.f32.gmra.mrb[0].mxu0 %v984
        %v1054 = vpop.f32.mrb[0].mxu0
        %v1055 = vadd.f32 0.0, %v1054
        %v1056 = vpop.f32.mrb[0].mxu0
        %1057 = vdwg.mxu0
        %1058 = vrot.lane.b32.xlu0 %v524, 96
        %v1059 = vpop.permute.xlu0 %1058
        %v1060 = vsel %vm527, %v510, 0
        %v1062 = vsel %vm527, %v1059, 0
        %1064 = vmatprep.subr.mxu0 0.0
        %1065 = vmatpush1.xpose.msra.mxu0 %v1062
        %1066 = vmatprep.subr.mxu0 0.0
        %1067 = vmatpush1.xpose.msra.mxu0 0.0
        %1068 = vmatprep.subr.mxu0 0.0
        %1069 = vmatpush1.xpose.msra.mxu0 0.0
        %1070 = vmatprep.subr.mxu0 0.0
        %1071 = vmatpush1.xpose.msra.mxu0 0.0
        %1072 = vmatprep.subr.mxu0 0.0
        %1073 = vmatpush1.xpose.msra.mxu0 0.0
        %1074 = vmatprep.subr.mxu0 0.0
        %1075 = vmatpush1.xpose.msra.mxu0 0.0
        %1076 = vmatprep.subr.mxu0 0.0
        %1077 = vmatpush1.xpose.msra.mxu0 0.0
        %1078 = vmatprep.subr.mxu0 0.0
        %1079 = vmatpush1.xpose.msra.mxu0 0.0
        %1080 = vmatprep.subr.mxu0 0.0
        %1081 = vmatpush1.xpose.msra.mxu0 0.0
        %1082 = vmatprep.subr.mxu0 0.0
        %1083 = vmatpush1.xpose.msra.mxu0 0.0
        %1084 = vmatprep.subr.mxu0 0.0
        %1085 = vmatpush1.xpose.msra.mxu0 0.0
        %1086 = vmatprep.subr.mxu0 0.0
        %1087 = vmatpush1.xpose.msra.mxu0 0.0
        %1088 = vmatprep.subr.mxu0 0.0
        %1089 = vmatpush1.xpose.msra.mxu0 0.0
        %1090 = vmatprep.subr.mxu0 0.0
        %1091 = vmatpush1.xpose.msra.mxu0 0.0
        %1092 = vmatprep.subr.mxu0 0.0
        %1093 = vmatpush1.xpose.msra.mxu0 0.0
        %1094 = vmatprep.subr.mxu0 0.0
        %1095 = vmatpush1.xpose.msra.mxu0 0.0
        %1096 = vmatprep.subr.mxu0 0.0
        %1097 = vmatpush1.xpose.msra.mxu0 0.0
        %1098 = vmatprep.subr.mxu0 0.0
        %1099 = vmatpush1.xpose.msra.mxu0 0.0
        %1100 = vmatprep.subr.mxu0 0.0
        %1101 = vmatpush1.xpose.msra.mxu0 0.0
        %1102 = vmatprep.subr.mxu0 0.0
        %1103 = vmatpush1.xpose.msra.mxu0 0.0
        %1104 = vmatprep.subr.mxu0 0.0
        %1105 = vmatpush1.xpose.msra.mxu0 0.0
        %1106 = vmatprep.subr.mxu0 0.0
        %1107 = vmatpush1.xpose.msra.mxu0 0.0
        %1108 = vmatprep.subr.mxu0 0.0
        %1109 = vmatpush1.xpose.msra.mxu0 0.0
        %1110 = vmatprep.subr.mxu0 0.0
        %1111 = vmatpush1.xpose.msra.mxu0 0.0
        %1112 = vmatprep.subr.mxu0 0.0
        %1113 = vmatpush1.xpose.msra.mxu0 0.0
        %1114 = vmatprep.subr.mxu0 0.0
        %1115 = vmatpush1.xpose.msra.mxu0 0.0
        %1116 = vmatprep.subr.mxu0 0.0
        %1117 = vmatpush1.xpose.msra.mxu0 0.0
        %1118 = vmatprep.subr.mxu0 0.0
        %1119 = vmatpush1.xpose.msra.mxu0 0.0
        %1120 = vmatprep.subr.mxu0 0.0
        %1121 = vmatpush1.xpose.msra.mxu0 0.0
        %1122 = vmatprep.subr.mxu0 0.0
        %1123 = vmatpush1.xpose.msra.mxu0 0.0
        %1124 = vmatprep.subr.mxu0 0.0
        %1125 = vmatpush1.xpose.msra.mxu0 0.0
        %1126 = vmatprep.subr.mxu0 0.0
        %1127 = vmatpush1.xpose.msra.mxu0 0.0
        %1128 = vmatprep.mubr.f32.mxu0 0.0
        %1129 = vmatmul.mubr.f32.gmra.mrb[0].mxu0 %v1060
        %v1130 = vpop.f32.mrb[0].mxu0
        %v1131 = vadd.f32 0.0, %v1130
        %v1132 = vpop.f32.mrb[0].mxu0
        %1133 = vdwg.mxu0
        %v1134 = vsel %vm527, %v599, -inf
        %1135 = vmax.xlane.f32.xlu0 %v1134
        %v1136 = vpop.xlane.xlu0 %1135
        %v1137 = vsel %vm527, %v675, -inf
        %1138 = vmax.xlane.f32.xlu0 %v1137
        %v1139 = vpop.xlane.xlu0 %1138
        %v1140 = vsel %vm527, %v751, -inf
        %1141 = vmax.xlane.f32.xlu0 %v1140
        %v1142 = vpop.xlane.xlu0 %1141
        %v1143 = vsel %vm527, %v827, -inf
        %1144 = vmax.xlane.f32.xlu0 %v1143
        %v1145 = vpop.xlane.xlu0 %1144
        %v1146 = vsel %vm527, %v903, -inf
        %1147 = vmax.xlane.f32.xlu0 %v1146
        %v1148 = vpop.xlane.xlu0 %1147
        %v1149 = vsel %vm527, %v979, -inf
        %1150 = vmax.xlane.f32.xlu0 %v1149
        %v1151 = vpop.xlane.xlu0 %1150
        %v1152 = vsel %vm527, %v1055, -inf
        %1153 = vmax.xlane.f32.xlu0 %v1152
        %v1154 = vpop.xlane.xlu0 %1153
        %v1155 = vsel %vm527, %v1131, -inf
        %1156 = vmax.xlane.f32.xlu0 %v1155
        %v1157 = vpop.xlane.xlu0 %1156
        %v1158 = vsub.f32 %v599, %v1136
        %v1159 = vsub.f32 %v675, %v1139
        %v1160 = vsub.f32 %v751, %v1142
        %v1161 = vsub.f32 %v827, %v1145
        %v1162 = vsub.f32 %v903, %v1148
        %v1163 = vsub.f32 %v979, %v1151
        %v1164 = vsub.f32 %v1055, %v1154
        %v1165 = vsub.f32 %v1131, %v1157
        %v1166 = vmul.f32 %v1158, 1.442695
        %v1167 = vpow.pop %v1166
        %v1168 = vmul.f32 %v1159, 1.442695
        %v1169 = vpow.pop %v1168
        %v1170 = vmul.f32 %v1160, 1.442695
        %v1171 = vpow.pop %v1170
        %v1172 = vmul.f32 %v1161, 1.442695
        %v1173 = vpow.pop %v1172
        %v1174 = vmul.f32 %v1162, 1.442695
        %v1175 = vpow.pop %v1174
        %v1176 = vmul.f32 %v1163, 1.442695
        %v1177 = vpow.pop %v1176
        %v1178 = vmul.f32 %v1164, 1.442695
        %v1179 = vpow.pop %v1178
        %v1180 = vmul.f32 %v1165, 1.442695
        %v1181 = vpow.pop %v1180
        %v1182 = vsel %vm527, %v1167, 0.0
        %1183 = vadd.xlane.f32.xlu0 %v1182
        %v1184 = vpop.xlane.xlu0 %1183
        %v1185 = vsel %vm527, %v1169, 0.0
        %1186 = vadd.xlane.f32.xlu0 %v1185
        %v1187 = vpop.xlane.xlu0 %1186
        %v1188 = vsel %vm527, %v1171, 0.0
        %1189 = vadd.xlane.f32.xlu0 %v1188
        %v1190 = vpop.xlane.xlu0 %1189
        %v1191 = vsel %vm527, %v1173, 0.0
        %1192 = vadd.xlane.f32.xlu0 %v1191
        %v1193 = vpop.xlane.xlu0 %1192
        %v1194 = vsel %vm527, %v1175, 0.0
        %1195 = vadd.xlane.f32.xlu0 %v1194
        %v1196 = vpop.xlane.xlu0 %1195
        %v1197 = vsel %vm527, %v1177, 0.0
        %1198 = vadd.xlane.f32.xlu0 %v1197
        %v1199 = vpop.xlane.xlu0 %1198
        %v1200 = vsel %vm527, %v1179, 0.0
        %1201 = vadd.xlane.f32.xlu0 %v1200
        %v1202 = vpop.xlane.xlu0 %1201
        %v1203 = vsel %vm527, %v1181, 0.0
        %1204 = vadd.xlane.f32.xlu0 %v1203
        %v1205 = vpop.xlane.xlu0 %1204
        %v1206 = vrcp.pop %v1184
        %v1207 = vrcp.pop %v1187
        %v1208 = vrcp.pop %v1190
        %v1209 = vrcp.pop %v1193
        %v1210 = vrcp.pop %v1196
        %v1211 = vrcp.pop %v1199
        %v1212 = vrcp.pop %v1202
        %v1213 = vrcp.pop %v1205
        %v1214 = vmul.f32 %v1167, %v1206
        %v1215 = vmul.f32 %v1169, %v1207
        %v1216 = vmul.f32 %v1171, %v1208
        %v1217 = vmul.f32 %v1173, %v1209
        %v1218 = vmul.f32 %v1175, %v1210
        %v1219 = vmul.f32 %v1177, %v1211
        %v1220 = vmul.f32 %v1179, %v1212
        %v1221 = vmul.f32 %v1181, %v1213
        %1222 = vrot.lane.b32.xlu0 %v489, 64
        %v1223 = vpop.permute.xlu0 %1222
        %v1226 = vsel %vm527, %v1214, 0
        %1228 = vmatprep.subr.mxu0 0.0
        %1229 = vmatpush1.msra.mxu0 %v1223
        %1230 = vmatprep.subr.mxu0 0.0
        %1231 = vmatpush1.msra.mxu0 0.0
        %1232 = vmatprep.subr.mxu0 0.0
        %1233 = vmatpush1.msra.mxu0 0.0
        %1234 = vmatprep.subr.mxu0 0.0
        %1235 = vmatpush1.msra.mxu0 0.0
        %1236 = vmatprep.subr.mxu0 0.0
        %1237 = vmatpush1.msra.mxu0 0.0
        %1238 = vmatprep.subr.mxu0 0.0
        %1239 = vmatpush1.msra.mxu0 0.0
        %1240 = vmatprep.subr.mxu0 0.0
        %1241 = vmatpush1.msra.mxu0 0.0
        %1242 = vmatprep.subr.mxu0 0.0
        %1243 = vmatpush1.msra.mxu0 0.0
        %1244 = vmatprep.subr.mxu0 0.0
        %1245 = vmatpush1.msra.mxu0 0.0
        %1246 = vmatprep.subr.mxu0 0.0
        %1247 = vmatpush1.msra.mxu0 0.0
        %1248 = vmatprep.subr.mxu0 0.0
        %1249 = vmatpush1.msra.mxu0 0.0
        %1250 = vmatprep.subr.mxu0 0.0
        %1251 = vmatpush1.msra.mxu0 0.0
        %1252 = vmatprep.subr.mxu0 0.0
        %1253 = vmatpush1.msra.mxu0 0.0
        %1254 = vmatprep.subr.mxu0 0.0
        %1255 = vmatpush1.msra.mxu0 0.0
        %1256 = vmatprep.subr.mxu0 0.0
        %1257 = vmatpush1.msra.mxu0 0.0
        %1258 = vmatprep.subr.mxu0 0.0
        %1259 = vmatpush1.msra.mxu0 0.0
        %1260 = vmatprep.subr.mxu0 0.0
        %1261 = vmatpush1.msra.mxu0 0.0
        %1262 = vmatprep.subr.mxu0 0.0
        %1263 = vmatpush1.msra.mxu0 0.0
        %1264 = vmatprep.subr.mxu0 0.0
        %1265 = vmatpush1.msra.mxu0 0.0
        %1266 = vmatprep.subr.mxu0 0.0
        %1267 = vmatpush1.msra.mxu0 0.0
        %1268 = vmatprep.subr.mxu0 0.0
        %1269 = vmatpush1.msra.mxu0 0.0
        %1270 = vmatprep.subr.mxu0 0.0
        %1271 = vmatpush1.msra.mxu0 0.0
        %1272 = vmatprep.subr.mxu0 0.0
        %1273 = vmatpush1.msra.mxu0 0.0
        %1274 = vmatprep.subr.mxu0 0.0
        %1275 = vmatpush1.msra.mxu0 0.0
        %1276 = vmatprep.subr.mxu0 0.0
        %1277 = vmatpush1.msra.mxu0 0.0
        %1278 = vmatprep.subr.mxu0 0.0
        %1279 = vmatpush1.msra.mxu0 0.0
        %1280 = vmatprep.subr.mxu0 0.0
        %1281 = vmatpush1.msra.mxu0 0.0
        %1282 = vmatprep.subr.mxu0 0.0
        %1283 = vmatpush1.msra.mxu0 0.0
        %1284 = vmatprep.subr.mxu0 0.0
        %1285 = vmatpush1.msra.mxu0 0.0
        %1286 = vmatprep.subr.mxu0 0.0
        %1287 = vmatpush1.msra.mxu0 0.0
        %1288 = vmatprep.subr.mxu0 0.0
        %1289 = vmatpush1.msra.mxu0 0.0
        %1290 = vmatprep.subr.mxu0 0.0
        %1291 = vmatpush1.msra.mxu0 0.0
        %1292 = vmatprep.mubr.f32.mxu0 0.0
        %1293 = vmatmul.mubr.f32.gmra.mrb[0].mxu0 %v1226
        %v1294 = vpop.f32.mrb[0].mxu0
        %v1295 = vadd.f32 0.0, %v1294
        %v1296 = vpop.f32.mrb[0].mxu0
        %1297 = vdwg.mxu0
        %1298 = vrot.lane.b32.xlu0 %v513, 64
        %v1299 = vpop.permute.xlu0 %1298
        %v1302 = vsel %vm527, %v1215, 0
        %1304 = vmatprep.subr.mxu0 0.0
        %1305 = vmatpush1.msra.mxu0 %v1299
        %1306 = vmatprep.subr.mxu0 0.0
        %1307 = vmatpush1.msra.mxu0 0.0
        %1308 = vmatprep.subr.mxu0 0.0
        %1309 = vmatpush1.msra.mxu0 0.0
        %1310 = vmatprep.subr.mxu0 0.0
        %1311 = vmatpush1.msra.mxu0 0.0
        %1312 = vmatprep.subr.mxu0 0.0
        %1313 = vmatpush1.msra.mxu0 0.0
        %1314 = vmatprep.subr.mxu0 0.0
        %1315 = vmatpush1.msra.mxu0 0.0
        %1316 = vmatprep.subr.mxu0 0.0
        %1317 = vmatpush1.msra.mxu0 0.0
        %1318 = vmatprep.subr.mxu0 0.0
        %1319 = vmatpush1.msra.mxu0 0.0
        %1320 = vmatprep.subr.mxu0 0.0
        %1321 = vmatpush1.msra.mxu0 0.0
        %1322 = vmatprep.subr.mxu0 0.0
        %1323 = vmatpush1.msra.mxu0 0.0
        %1324 = vmatprep.subr.mxu0 0.0
        %1325 = vmatpush1.msra.mxu0 0.0
        %1326 = vmatprep.subr.mxu0 0.0
        %1327 = vmatpush1.msra.mxu0 0.0
        %1328 = vmatprep.subr.mxu0 0.0
        %1329 = vmatpush1.msra.mxu0 0.0
        %1330 = vmatprep.subr.mxu0 0.0
        %1331 = vmatpush1.msra.mxu0 0.0
        %1332 = vmatprep.subr.mxu0 0.0
        %1333 = vmatpush1.msra.mxu0 0.0
        %1334 = vmatprep.subr.mxu0 0.0
        %1335 = vmatpush1.msra.mxu0 0.0
        %1336 = vmatprep.subr.mxu0 0.0
        %1337 = vmatpush1.msra.mxu0 0.0
        %1338 = vmatprep.subr.mxu0 0.0
        %1339 = vmatpush1.msra.mxu0 0.0
        %1340 = vmatprep.subr.mxu0 0.0
        %1341 = vmatpush1.msra.mxu0 0.0
        %1342 = vmatprep.subr.mxu0 0.0
        %1343 = vmatpush1.msra.mxu0 0.0
        %1344 = vmatprep.subr.mxu0 0.0
        %1345 = vmatpush1.msra.mxu0 0.0
        %1346 = vmatprep.subr.mxu0 0.0
        %1347 = vmatpush1.msra.mxu0 0.0
        %1348 = vmatprep.subr.mxu0 0.0
        %1349 = vmatpush1.msra.mxu0 0.0
        %1350 = vmatprep.subr.mxu0 0.0
        %1351 = vmatpush1.msra.mxu0 0.0
        %1352 = vmatprep.subr.mxu0 0.0
        %1353 = vmatpush1.msra.mxu0 0.0
        %1354 = vmatprep.subr.mxu0 0.0
        %1355 = vmatpush1.msra.mxu0 0.0
        %1356 = vmatprep.subr.mxu0 0.0
        %1357 = vmatpush1.msra.mxu0 0.0
        %1358 = vmatprep.subr.mxu0 0.0
        %1359 = vmatpush1.msra.mxu0 0.0
        %1360 = vmatprep.subr.mxu0 0.0
        %1361 = vmatpush1.msra.mxu0 0.0
        %1362 = vmatprep.subr.mxu0 0.0
        %1363 = vmatpush1.msra.mxu0 0.0
        %1364 = vmatprep.subr.mxu0 0.0
        %1365 = vmatpush1.msra.mxu0 0.0
        %1366 = vmatprep.subr.mxu0 0.0
        %1367 = vmatpush1.msra.mxu0 0.0
        %1368 = vmatprep.mubr.f32.mxu0 0.0
        %1369 = vmatmul.mubr.f32.gmra.mrb[0].mxu0 %v1302
        %v1370 = vpop.f32.mrb[0].mxu0
        %v1371 = vadd.f32 0.0, %v1370
        %v1372 = vpop.f32.mrb[0].mxu0
        %1373 = vdwg.mxu0
        %1374 = vrot.lane.b32.xlu0 %v515, 64
        %v1375 = vpop.permute.xlu0 %1374
        %v1378 = vsel %vm527, %v1216, 0
        %1380 = vmatprep.subr.mxu0 0.0
        %1381 = vmatpush1.msra.mxu0 %v1375
        %1382 = vmatprep.subr.mxu0 0.0
        %1383 = vmatpush1.msra.mxu0 0.0
        %1384 = vmatprep.subr.mxu0 0.0
        %1385 = vmatpush1.msra.mxu0 0.0
        %1386 = vmatprep.subr.mxu0 0.0
        %1387 = vmatpush1.msra.mxu0 0.0
        %1388 = vmatprep.subr.mxu0 0.0
        %1389 = vmatpush1.msra.mxu0 0.0
        %1390 = vmatprep.subr.mxu0 0.0
        %1391 = vmatpush1.msra.mxu0 0.0
        %1392 = vmatprep.subr.mxu0 0.0
        %1393 = vmatpush1.msra.mxu0 0.0
        %1394 = vmatprep.subr.mxu0 0.0
        %1395 = vmatpush1.msra.mxu0 0.0
        %1396 = vmatprep.subr.mxu0 0.0
        %1397 = vmatpush1.msra.mxu0 0.0
        %1398 = vmatprep.subr.mxu0 0.0
        %1399 = vmatpush1.msra.mxu0 0.0
        %1400 = vmatprep.subr.mxu0 0.0
        %1401 = vmatpush1.msra.mxu0 0.0
        %1402 = vmatprep.subr.mxu0 0.0
        %1403 = vmatpush1.msra.mxu0 0.0
        %1404 = vmatprep.subr.mxu0 0.0
        %1405 = vmatpush1.msra.mxu0 0.0
        %1406 = vmatprep.subr.mxu0 0.0
        %1407 = vmatpush1.msra.mxu0 0.0
        %1408 = vmatprep.subr.mxu0 0.0
        %1409 = vmatpush1.msra.mxu0 0.0
        %1410 = vmatprep.subr.mxu0 0.0
        %1411 = vmatpush1.msra.mxu0 0.0
        %1412 = vmatprep.subr.mxu0 0.0
        %1413 = vmatpush1.msra.mxu0 0.0
        %1414 = vmatprep.subr.mxu0 0.0
        %1415 = vmatpush1.msra.mxu0 0.0
        %1416 = vmatprep.subr.mxu0 0.0
        %1417 = vmatpush1.msra.mxu0 0.0
        %1418 = vmatprep.subr.mxu0 0.0
        %1419 = vmatpush1.msra.mxu0 0.0
        %1420 = vmatprep.subr.mxu0 0.0
        %1421 = vmatpush1.msra.mxu0 0.0
        %1422 = vmatprep.subr.mxu0 0.0
        %1423 = vmatpush1.msra.mxu0 0.0
        %1424 = vmatprep.subr.mxu0 0.0
        %1425 = vmatpush1.msra.mxu0 0.0
        %1426 = vmatprep.subr.mxu0 0.0
        %1427 = vmatpush1.msra.mxu0 0.0
        %1428 = vmatprep.subr.mxu0 0.0
        %1429 = vmatpush1.msra.mxu0 0.0
        %1430 = vmatprep.subr.mxu0 0.0
        %1431 = vmatpush1.msra.mxu0 0.0
        %1432 = vmatprep.subr.mxu0 0.0
        %1433 = vmatpush1.msra.mxu0 0.0
        %1434 = vmatprep.subr.mxu0 0.0
        %1435 = vmatpush1.msra.mxu0 0.0
        %1436 = vmatprep.subr.mxu0 0.0
        %1437 = vmatpush1.msra.mxu0 0.0
        %1438 = vmatprep.subr.mxu0 0.0
        %1439 = vmatpush1.msra.mxu0 0.0
        %1440 = vmatprep.subr.mxu0 0.0
        %1441 = vmatpush1.msra.mxu0 0.0
        %1442 = vmatprep.subr.mxu0 0.0
        %1443 = vmatpush1.msra.mxu0 0.0
        %1444 = vmatprep.mubr.f32.mxu0 0.0
        %1445 = vmatmul.mubr.f32.gmra.mrb[0].mxu0 %v1378
        %v1446 = vpop.f32.mrb[0].mxu0
        %v1447 = vadd.f32 0.0, %v1446
        %v1448 = vpop.f32.mrb[0].mxu0
        %1449 = vdwg.mxu0
        %1450 = vrot.lane.b32.xlu0 %v517, 64
        %v1451 = vpop.permute.xlu0 %1450
        %v1454 = vsel %vm527, %v1217, 0
        %1456 = vmatprep.subr.mxu0 0.0
        %1457 = vmatpush1.msra.mxu0 %v1451
        %1458 = vmatprep.subr.mxu0 0.0
        %1459 = vmatpush1.msra.mxu0 0.0
        %1460 = vmatprep.subr.mxu0 0.0
        %1461 = vmatpush1.msra.mxu0 0.0
        %1462 = vmatprep.subr.mxu0 0.0
        %1463 = vmatpush1.msra.mxu0 0.0
        %1464 = vmatprep.subr.mxu0 0.0
        %1465 = vmatpush1.msra.mxu0 0.0
        %1466 = vmatprep.subr.mxu0 0.0
        %1467 = vmatpush1.msra.mxu0 0.0
        %1468 = vmatprep.subr.mxu0 0.0
        %1469 = vmatpush1.msra.mxu0 0.0
        %1470 = vmatprep.subr.mxu0 0.0
        %1471 = vmatpush1.msra.mxu0 0.0
        %1472 = vmatprep.subr.mxu0 0.0
        %1473 = vmatpush1.msra.mxu0 0.0
        %1474 = vmatprep.subr.mxu0 0.0
        %1475 = vmatpush1.msra.mxu0 0.0
        %1476 = vmatprep.subr.mxu0 0.0
        %1477 = vmatpush1.msra.mxu0 0.0
        %1478 = vmatprep.subr.mxu0 0.0
        %1479 = vmatpush1.msra.mxu0 0.0
        %1480 = vmatprep.subr.mxu0 0.0
        %1481 = vmatpush1.msra.mxu0 0.0
        %1482 = vmatprep.subr.mxu0 0.0
        %1483 = vmatpush1.msra.mxu0 0.0
        %1484 = vmatprep.subr.mxu0 0.0
        %1485 = vmatpush1.msra.mxu0 0.0
        %1486 = vmatprep.subr.mxu0 0.0
        %1487 = vmatpush1.msra.mxu0 0.0
        %1488 = vmatprep.subr.mxu0 0.0
        %1489 = vmatpush1.msra.mxu0 0.0
        %1490 = vmatprep.subr.mxu0 0.0
        %1491 = vmatpush1.msra.mxu0 0.0
        %1492 = vmatprep.subr.mxu0 0.0
        %1493 = vmatpush1.msra.mxu0 0.0
        %1494 = vmatprep.subr.mxu0 0.0
        %1495 = vmatpush1.msra.mxu0 0.0
        %1496 = vmatprep.subr.mxu0 0.0
        %1497 = vmatpush1.msra.mxu0 0.0
        %1498 = vmatprep.subr.mxu0 0.0
        %1499 = vmatpush1.msra.mxu0 0.0
        %1500 = vmatprep.subr.mxu0 0.0
        %1501 = vmatpush1.msra.mxu0 0.0
        %1502 = vmatprep.subr.mxu0 0.0
        %1503 = vmatpush1.msra.mxu0 0.0
        %1504 = vmatprep.subr.mxu0 0.0
        %1505 = vmatpush1.msra.mxu0 0.0
        %1506 = vmatprep.subr.mxu0 0.0
        %1507 = vmatpush1.msra.mxu0 0.0
        %1508 = vmatprep.subr.mxu0 0.0
        %1509 = vmatpush1.msra.mxu0 0.0
        %1510 = vmatprep.subr.mxu0 0.0
        %1511 = vmatpush1.msra.mxu0 0.0
        %1512 = vmatprep.subr.mxu0 0.0
        %1513 = vmatpush1.msra.mxu0 0.0
        %1514 = vmatprep.subr.mxu0 0.0
        %1515 = vmatpush1.msra.mxu0 0.0
        %1516 = vmatprep.subr.mxu0 0.0
        %1517 = vmatpush1.msra.mxu0 0.0
        %1518 = vmatprep.subr.mxu0 0.0
        %1519 = vmatpush1.msra.mxu0 0.0
        %1520 = vmatprep.mubr.f32.mxu0 0.0
        %1521 = vmatmul.mubr.f32.gmra.mrb[0].mxu0 %v1454
        %v1522 = vpop.f32.mrb[0].mxu0
        %v1523 = vadd.f32 0.0, %v1522
        %v1524 = vpop.f32.mrb[0].mxu0
        %1525 = vdwg.mxu0
        %1526 = vrot.lane.b32.xlu0 %v492, 64
        %v1527 = vpop.permute.xlu0 %1526
        %v1530 = vsel %vm527, %v1218, 0
        %1532 = vmatprep.subr.mxu0 0.0
        %1533 = vmatpush1.msra.mxu0 %v1527
        %1534 = vmatprep.subr.mxu0 0.0
        %1535 = vmatpush1.msra.mxu0 0.0
        %1536 = vmatprep.subr.mxu0 0.0
        %1537 = vmatpush1.msra.mxu0 0.0
        %1538 = vmatprep.subr.mxu0 0.0
        %1539 = vmatpush1.msra.mxu0 0.0
        %1540 = vmatprep.subr.mxu0 0.0
        %1541 = vmatpush1.msra.mxu0 0.0
        %1542 = vmatprep.subr.mxu0 0.0
        %1543 = vmatpush1.msra.mxu0 0.0
        %1544 = vmatprep.subr.mxu0 0.0
        %1545 = vmatpush1.msra.mxu0 0.0
        %1546 = vmatprep.subr.mxu0 0.0
        %1547 = vmatpush1.msra.mxu0 0.0
        %1548 = vmatprep.subr.mxu0 0.0
        %1549 = vmatpush1.msra.mxu0 0.0
        %1550 = vmatprep.subr.mxu0 0.0
        %1551 = vmatpush1.msra.mxu0 0.0
        %1552 = vmatprep.subr.mxu0 0.0
        %1553 = vmatpush1.msra.mxu0 0.0
        %1554 = vmatprep.subr.mxu0 0.0
        %1555 = vmatpush1.msra.mxu0 0.0
        %1556 = vmatprep.subr.mxu0 0.0
        %1557 = vmatpush1.msra.mxu0 0.0
        %1558 = vmatprep.subr.mxu0 0.0
        %1559 = vmatpush1.msra.mxu0 0.0
        %1560 = vmatprep.subr.mxu0 0.0
        %1561 = vmatpush1.msra.mxu0 0.0
        %1562 = vmatprep.subr.mxu0 0.0
        %1563 = vmatpush1.msra.mxu0 0.0
        %1564 = vmatprep.subr.mxu0 0.0
        %1565 = vmatpush1.msra.mxu0 0.0
        %1566 = vmatprep.subr.mxu0 0.0
        %1567 = vmatpush1.msra.mxu0 0.0
        %1568 = vmatprep.subr.mxu0 0.0
        %1569 = vmatpush1.msra.mxu0 0.0
        %1570 = vmatprep.subr.mxu0 0.0
        %1571 = vmatpush1.msra.mxu0 0.0
        %1572 = vmatprep.subr.mxu0 0.0
        %1573 = vmatpush1.msra.mxu0 0.0
        %1574 = vmatprep.subr.mxu0 0.0
        %1575 = vmatpush1.msra.mxu0 0.0
        %1576 = vmatprep.subr.mxu0 0.0
        %1577 = vmatpush1.msra.mxu0 0.0
        %1578 = vmatprep.subr.mxu0 0.0
        %1579 = vmatpush1.msra.mxu0 0.0
        %1580 = vmatprep.subr.mxu0 0.0
        %1581 = vmatpush1.msra.mxu0 0.0
        %1582 = vmatprep.subr.mxu0 0.0
        %1583 = vmatpush1.msra.mxu0 0.0
        %1584 = vmatprep.subr.mxu0 0.0
        %1585 = vmatpush1.msra.mxu0 0.0
        %1586 = vmatprep.subr.mxu0 0.0
        %1587 = vmatpush1.msra.mxu0 0.0
        %1588 = vmatprep.subr.mxu0 0.0
        %1589 = vmatpush1.msra.mxu0 0.0
        %1590 = vmatprep.subr.mxu0 0.0
        %1591 = vmatpush1.msra.mxu0 0.0
        %1592 = vmatprep.subr.mxu0 0.0
        %1593 = vmatpush1.msra.mxu0 0.0
        %1594 = vmatprep.subr.mxu0 0.0
        %1595 = vmatpush1.msra.mxu0 0.0
        %1596 = vmatprep.mubr.f32.mxu0 0.0
        %1597 = vmatmul.mubr.f32.gmra.mrb[0].mxu0 %v1530
        %v1598 = vpop.f32.mrb[0].mxu0
        %v1599 = vadd.f32 0.0, %v1598
        %v1600 = vpop.f32.mrb[0].mxu0
        %1601 = vdwg.mxu0
        %1602 = vrot.lane.b32.xlu0 %v520, 64
        %v1603 = vpop.permute.xlu0 %1602
        %v1606 = vsel %vm527, %v1219, 0
        %1608 = vmatprep.subr.mxu0 0.0
        %1609 = vmatpush1.msra.mxu0 %v1603
        %1610 = vmatprep.subr.mxu0 0.0
        %1611 = vmatpush1.msra.mxu0 0.0
        %1612 = vmatprep.subr.mxu0 0.0
        %1613 = vmatpush1.msra.mxu0 0.0
        %1614 = vmatprep.subr.mxu0 0.0
        %1615 = vmatpush1.msra.mxu0 0.0
        %1616 = vmatprep.subr.mxu0 0.0
        %1617 = vmatpush1.msra.mxu0 0.0
        %1618 = vmatprep.subr.mxu0 0.0
        %1619 = vmatpush1.msra.mxu0 0.0
        %1620 = vmatprep.subr.mxu0 0.0
        %1621 = vmatpush1.msra.mxu0 0.0
        %1622 = vmatprep.subr.mxu0 0.0
        %1623 = vmatpush1.msra.mxu0 0.0
        %1624 = vmatprep.subr.mxu0 0.0
        %1625 = vmatpush1.msra.mxu0 0.0
        %1626 = vmatprep.subr.mxu0 0.0
        %1627 = vmatpush1.msra.mxu0 0.0
        %1628 = vmatprep.subr.mxu0 0.0
        %1629 = vmatpush1.msra.mxu0 0.0
        %1630 = vmatprep.subr.mxu0 0.0
        %1631 = vmatpush1.msra.mxu0 0.0
        %1632 = vmatprep.subr.mxu0 0.0
        %1633 = vmatpush1.msra.mxu0 0.0
        %1634 = vmatprep.subr.mxu0 0.0
        %1635 = vmatpush1.msra.mxu0 0.0
        %1636 = vmatprep.subr.mxu0 0.0
        %1637 = vmatpush1.msra.mxu0 0.0
        %1638 = vmatprep.subr.mxu0 0.0
        %1639 = vmatpush1.msra.mxu0 0.0
        %1640 = vmatprep.subr.mxu0 0.0
        %1641 = vmatpush1.msra.mxu0 0.0
        %1642 = vmatprep.subr.mxu0 0.0
        %1643 = vmatpush1.msra.mxu0 0.0
        %1644 = vmatprep.subr.mxu0 0.0
        %1645 = vmatpush1.msra.mxu0 0.0
        %1646 = vmatprep.subr.mxu0 0.0
        %1647 = vmatpush1.msra.mxu0 0.0
        %1648 = vmatprep.subr.mxu0 0.0
        %1649 = vmatpush1.msra.mxu0 0.0
        %1650 = vmatprep.subr.mxu0 0.0
        %1651 = vmatpush1.msra.mxu0 0.0
        %1652 = vmatprep.subr.mxu0 0.0
        %1653 = vmatpush1.msra.mxu0 0.0
        %1654 = vmatprep.subr.mxu0 0.0
        %1655 = vmatpush1.msra.mxu0 0.0
        %1656 = vmatprep.subr.mxu0 0.0
        %1657 = vmatpush1.msra.mxu0 0.0
        %1658 = vmatprep.subr.mxu0 0.0
        %1659 = vmatpush1.msra.mxu0 0.0
        %1660 = vmatprep.subr.mxu0 0.0
        %1661 = vmatpush1.msra.mxu0 0.0
        %1662 = vmatprep.subr.mxu0 0.0
        %1663 = vmatpush1.msra.mxu0 0.0
        %1664 = vmatprep.subr.mxu0 0.0
        %1665 = vmatpush1.msra.mxu0 0.0
        %1666 = vmatprep.subr.mxu0 0.0
        %1667 = vmatpush1.msra.mxu0 0.0
        %1668 = vmatprep.subr.mxu0 0.0
        %1669 = vmatpush1.msra.mxu0 0.0
        %1670 = vmatprep.subr.mxu0 0.0
        %1671 = vmatpush1.msra.mxu0 0.0
        %1672 = vmatprep.mubr.f32.mxu0 0.0
        %1673 = vmatmul.mubr.f32.gmra.mrb[0].mxu0 %v1606
        %v1674 = vpop.f32.mrb[0].mxu0
        %v1675 = vadd.f32 0.0, %v1674
        %v1676 = vpop.f32.mrb[0].mxu0
        %1677 = vdwg.mxu0
        %1678 = vrot.lane.b32.xlu0 %v522, 64
        %v1679 = vpop.permute.xlu0 %1678
        %v1682 = vsel %vm527, %v1220, 0
        %1684 = vmatprep.subr.mxu0 0.0
        %1685 = vmatpush1.msra.mxu0 %v1679
        %1686 = vmatprep.subr.mxu0 0.0
        %1687 = vmatpush1.msra.mxu0 0.0
        %1688 = vmatprep.subr.mxu0 0.0
        %1689 = vmatpush1.msra.mxu0 0.0
        %1690 = vmatprep.subr.mxu0 0.0
        %1691 = vmatpush1.msra.mxu0 0.0
        %1692 = vmatprep.subr.mxu0 0.0
        %1693 = vmatpush1.msra.mxu0 0.0
        %1694 = vmatprep.subr.mxu0 0.0
        %1695 = vmatpush1.msra.mxu0 0.0
        %1696 = vmatprep.subr.mxu0 0.0
        %1697 = vmatpush1.msra.mxu0 0.0
        %1698 = vmatprep.subr.mxu0 0.0
        %1699 = vmatpush1.msra.mxu0 0.0
        %1700 = vmatprep.subr.mxu0 0.0
        %1701 = vmatpush1.msra.mxu0 0.0
        %1702 = vmatprep.subr.mxu0 0.0
        %1703 = vmatpush1.msra.mxu0 0.0
        %1704 = vmatprep.subr.mxu0 0.0
        %1705 = vmatpush1.msra.mxu0 0.0
        %1706 = vmatprep.subr.mxu0 0.0
        %1707 = vmatpush1.msra.mxu0 0.0
        %1708 = vmatprep.subr.mxu0 0.0
        %1709 = vmatpush1.msra.mxu0 0.0
        %1710 = vmatprep.subr.mxu0 0.0
        %1711 = vmatpush1.msra.mxu0 0.0
        %1712 = vmatprep.subr.mxu0 0.0
        %1713 = vmatpush1.msra.mxu0 0.0
        %1714 = vmatprep.subr.mxu0 0.0
        %1715 = vmatpush1.msra.mxu0 0.0
        %1716 = vmatprep.subr.mxu0 0.0
        %1717 = vmatpush1.msra.mxu0 0.0
        %1718 = vmatprep.subr.mxu0 0.0
        %1719 = vmatpush1.msra.mxu0 0.0
        %1720 = vmatprep.subr.mxu0 0.0
        %1721 = vmatpush1.msra.mxu0 0.0
        %1722 = vmatprep.subr.mxu0 0.0
        %1723 = vmatpush1.msra.mxu0 0.0
        %1724 = vmatprep.subr.mxu0 0.0
        %1725 = vmatpush1.msra.mxu0 0.0
        %1726 = vmatprep.subr.mxu0 0.0
        %1727 = vmatpush1.msra.mxu0 0.0
        %1728 = vmatprep.subr.mxu0 0.0
        %1729 = vmatpush1.msra.mxu0 0.0
        %1730 = vmatprep.subr.mxu0 0.0
        %1731 = vmatpush1.msra.mxu0 0.0
        %1732 = vmatprep.subr.mxu0 0.0
        %1733 = vmatpush1.msra.mxu0 0.0
        %1734 = vmatprep.subr.mxu0 0.0
        %1735 = vmatpush1.msra.mxu0 0.0
        %1736 = vmatprep.subr.mxu0 0.0
        %1737 = vmatpush1.msra.mxu0 0.0
        %1738 = vmatprep.subr.mxu0 0.0
        %1739 = vmatpush1.msra.mxu0 0.0
        %1740 = vmatprep.subr.mxu0 0.0
        %1741 = vmatpush1.msra.mxu0 0.0
        %1742 = vmatprep.subr.mxu0 0.0
        %1743 = vmatpush1.msra.mxu0 0.0
        %1744 = vmatprep.subr.mxu0 0.0
        %1745 = vmatpush1.msra.mxu0 0.0
        %1746 = vmatprep.subr.mxu0 0.0
        %1747 = vmatpush1.msra.mxu0 0.0
        %1748 = vmatprep.mubr.f32.mxu0 0.0
        %1749 = vmatmul.mubr.f32.gmra.mrb[0].mxu0 %v1682
        %v1750 = vpop.f32.mrb[0].mxu0
        %v1751 = vadd.f32 0.0, %v1750
        %v1752 = vpop.f32.mrb[0].mxu0
        %1753 = vdwg.mxu0
        %1754 = vrot.lane.b32.xlu0 %v524, 64
        %v1755 = vpop.permute.xlu0 %1754
        %v1758 = vsel %vm527, %v1221, 0
        %1760 = vmatprep.subr.mxu0 0.0
        %1761 = vmatpush1.msra.mxu0 %v1755
        %1762 = vmatprep.subr.mxu0 0.0
        %1763 = vmatpush1.msra.mxu0 0.0
        %1764 = vmatprep.subr.mxu0 0.0
        %1765 = vmatpush1.msra.mxu0 0.0
        %1766 = vmatprep.subr.mxu0 0.0
        %1767 = vmatpush1.msra.mxu0 0.0
        %1768 = vmatprep.subr.mxu0 0.0
        %1769 = vmatpush1.msra.mxu0 0.0
        %1770 = vmatprep.subr.mxu0 0.0
        %1771 = vmatpush1.msra.mxu0 0.0
        %1772 = vmatprep.subr.mxu0 0.0
        %1773 = vmatpush1.msra.mxu0 0.0
        %1774 = vmatprep.subr.mxu0 0.0
        %1775 = vmatpush1.msra.mxu0 0.0
        %1776 = vmatprep.subr.mxu0 0.0
        %1777 = vmatpush1.msra.mxu0 0.0
        %1778 = vmatprep.subr.mxu0 0.0
        %1779 = vmatpush1.msra.mxu0 0.0
        %1780 = vmatprep.subr.mxu0 0.0
        %1781 = vmatpush1.msra.mxu0 0.0
        %1782 = vmatprep.subr.mxu0 0.0
        %1783 = vmatpush1.msra.mxu0 0.0
        %1784 = vmatprep.subr.mxu0 0.0
        %1785 = vmatpush1.msra.mxu0 0.0
        %1786 = vmatprep.subr.mxu0 0.0
        %1787 = vmatpush1.msra.mxu0 0.0
        %1788 = vmatprep.subr.mxu0 0.0
        %1789 = vmatpush1.msra.mxu0 0.0
        %1790 = vmatprep.subr.mxu0 0.0
        %1791 = vmatpush1.msra.mxu0 0.0
        %1792 = vmatprep.subr.mxu0 0.0
        %1793 = vmatpush1.msra.mxu0 0.0
        %1794 = vmatprep.subr.mxu0 0.0
        %1795 = vmatpush1.msra.mxu0 0.0
        %1796 = vmatprep.subr.mxu0 0.0
        %1797 = vmatpush1.msra.mxu0 0.0
        %1798 = vmatprep.subr.mxu0 0.0
        %1799 = vmatpush1.msra.mxu0 0.0
        %1800 = vmatprep.subr.mxu0 0.0
        %1801 = vmatpush1.msra.mxu0 0.0
        %1802 = vmatprep.subr.mxu0 0.0
        %1803 = vmatpush1.msra.mxu0 0.0
        %1804 = vmatprep.subr.mxu0 0.0
        %1805 = vmatpush1.msra.mxu0 0.0
        %1806 = vmatprep.subr.mxu0 0.0
        %1807 = vmatpush1.msra.mxu0 0.0
        %1808 = vmatprep.subr.mxu0 0.0
        %1809 = vmatpush1.msra.mxu0 0.0
        %1810 = vmatprep.subr.mxu0 0.0
        %1811 = vmatpush1.msra.mxu0 0.0
        %1812 = vmatprep.subr.mxu0 0.0
        %1813 = vmatpush1.msra.mxu0 0.0
        %1814 = vmatprep.subr.mxu0 0.0
        %1815 = vmatpush1.msra.mxu0 0.0
        %1816 = vmatprep.subr.mxu0 0.0
        %1817 = vmatpush1.msra.mxu0 0.0
        %1818 = vmatprep.subr.mxu0 0.0
        %1819 = vmatpush1.msra.mxu0 0.0
        %1820 = vmatprep.subr.mxu0 0.0
        %1821 = vmatpush1.msra.mxu0 0.0
        %1822 = vmatprep.subr.mxu0 0.0
        %1823 = vmatpush1.msra.mxu0 0.0
        %1824 = vmatprep.mubr.f32.mxu0 0.0
        %1825 = vmatmul.mubr.f32.gmra.mrb[0].mxu0 %v1758
        %v1826 = vpop.f32.mrb[0].mxu0
        %v1827 = vadd.f32 0.0, %v1826
        %v1828 = vpop.f32.mrb[0].mxu0
        %1829 = vdwg.mxu0
        %1831 = vrot.lane.b32.xlu0 %v1371, 8
        %v1832 = vpop.permute.xlu0 %1831
        %1835 = vrot.lane.b32.xlu0 %v1447, 16
        %v1836 = vpop.permute.xlu0 %1835
        %1839 = vrot.lane.b32.xlu0 %v1523, 24
        %v1840 = vpop.permute.xlu0 %1839
        %v1842 = vsel %vm527, %v1295, %v1832
        %vm1843 = vcmask 130048
        %v1844 = vsel %vm1843, %v1842, %v1836
        %vm1845 = vcmask 195584
        %v1846 = vsel %vm1845, %v1844, %v1840
        %1848 = vrot.lane.b32.xlu0 %v1675, 8
        %v1849 = vpop.permute.xlu0 %1848
        %1852 = vrot.lane.b32.xlu0 %v1751, 16
        %v1853 = vpop.permute.xlu0 %1852
        %1856 = vrot.lane.b32.xlu0 %v1827, 24
        %v1857 = vpop.permute.xlu0 %1856
        %v1859 = vsel %vm527, %v1599, %v1849
        %v1860 = vsel %vm1843, %v1859, %v1853
        %v1861 = vsel %vm1845, %v1860, %v1857
        %v1862 = vpack.c.bf16 %v1861, %v1846
        %v1863 = vld [vmem:[%s355] sm:$0xf]
        %v1864 = vld [vmem:[%s355 + $0x4] sm:$0xf]
        %v1865 = vld [vmem:[%s355 + $0x8] sm:$0xf]
        %v1866 = vld [vmem:[%s355 + $0xc] sm:$0xf]
        %v1867 = vlaneseq
        %v1868 = vshrl.u32 %v1867, 7
        %v1869 = vsub.s32 5, %v1868
        %v1870 = vrot.slane %v389, %v1869
        %v1875 = vunpack.c.l.b16 %v1863
        %v1876 = vunpack.c.l.b16 %v1864
        %v1877 = vunpack.c.l.b16 %v1865
        %v1878 = vunpack.c.l.b16 %v1866
        %v1879 = vpack.c.b16 %v1876, %v1875
        %v1880 = vpack.c.b16 %v1878, %v1877
        %v1884 = vsel %vm390, %v1862, 0
        %1886 = vmatprep.subr.bf16.mxu0 0
        %1887 = vmatpush1.bf16.msra.mxu0 %v1879
        %1888 = vmatprep.subr.bf16.mxu0 0
        %1889 = vmatpush1.bf16.msra.mxu0 %v1880
        %1890 = vmatprep.subr.bf16.mxu0 0
        %1891 = vmatpush1.bf16.msra.mxu0 0
        %1892 = vmatprep.subr.bf16.mxu0 0
        %1893 = vmatpush1.bf16.msra.mxu0 0
        %1894 = vmatprep.subr.bf16.mxu0 0
        %1895 = vmatpush1.bf16.msra.mxu0 0
        %1896 = vmatprep.subr.bf16.mxu0 0
        %1897 = vmatpush1.bf16.msra.mxu0 0
        %1898 = vmatprep.subr.bf16.mxu0 0
        %1899 = vmatpush1.bf16.msra.mxu0 0
        %1900 = vmatprep.subr.bf16.mxu0 0
        %1901 = vmatpush1.bf16.msra.mxu0 0
        %1902 = vmatprep.subr.bf16.mxu0 0
        %1903 = vmatpush1.bf16.msra.mxu0 0
        %1904 = vmatprep.subr.bf16.mxu0 0
        %1905 = vmatpush1.bf16.msra.mxu0 0
        %1906 = vmatprep.subr.bf16.mxu0 0
        %1907 = vmatpush1.bf16.msra.mxu0 0
        %1908 = vmatprep.subr.bf16.mxu0 0
        %1909 = vmatpush1.bf16.msra.mxu0 0
        %1910 = vmatprep.subr.bf16.mxu0 0
        %1911 = vmatpush1.bf16.msra.mxu0 0
        %1912 = vmatprep.subr.bf16.mxu0 0
        %1913 = vmatpush1.bf16.msra.mxu0 0
        %1914 = vmatprep.subr.bf16.mxu0 0
        %1915 = vmatpush1.bf16.msra.mxu0 0
        %1916 = vmatprep.subr.bf16.mxu0 0
        %1917 = vmatpush1.bf16.msra.mxu0 0
        %1918 = vmatprep.mubr.bf16.mxu0 0
        %1919 = vmatmul.mubr.bf16.gmra.mrb[0].mxu0 %v1884
        %v1920 = vpop.f32.mrb[0].mxu0
        %v1921 = vadd.f32 %v1870, %v1920
        %v1922 = vpop.f32.mrb[0].mxu0
        %v1923 = vpop.f32.mrb[0].mxu0
        %v1924 = vadd.f32 %v1870, %v1923
        %v1925 = vpop.f32.mrb[0].mxu0
        %1926 = vdwg.mxu0
        %v1927 = vadd.f32 %v387, %v1921
        %v1928 = vadd.f32 %v388, %v1924
        %v1929 = vsel %vm390, %v1927, 0.0
        %1930 = vadd.xlane.f32.xlu0 %v1929
        %v1931 = vpop.xlane.xlu0 %1930
        %v1932 = vsel %vm390, %v1928, 0.0
        %1933 = vadd.xlane.f32.xlu0 %v1932
        %v1934 = vpop.xlane.xlu0 %1933
        %v1935 = vmul.f32 %v1931, %v397
        %v1936 = vmul.f32 %v1934, %v397
        %v1937 = vsub.f32 %v1927, %v1935
        %v1938 = vsub.f32 %v1928, %v1936
        %v1939 = vmul.f32 %v1937, %v1937
        %v1940 = vmul.f32 %v1938, %v1938
        %v1941 = vsel %vm390, %v1939, 0.0
        %1942 = vadd.xlane.f32.xlu0 %v1941
        %v1943 = vpop.xlane.xlu0 %1942
        %v1944 = vsel %vm390, %v1940, 0.0
        %1945 = vadd.xlane.f32.xlu0 %v1944
        %v1946 = vpop.xlane.xlu0 %1945
        %v1947 = vmul.f32 %v1943, %v397
        %v1948 = vmul.f32 %v1946, %v397
        %v1949 = vadd.f32 %v1947, 1e-05
        %v1950 = vadd.f32 %v1948, 1e-05
        %v1951 = vrsqrt.pop %v1949
        %v1952 = vrsqrt.pop %v1950
        %v1953 = vmul.f32 %v1937, %v1951
        %v1954 = vmul.f32 %v1938, %v1952
        %v1955 = vlaneseq
        %v1956 = vshrl.u32 %v1955, 7
        %v1957 = vsub.s32 2, %v1956
        %v1958 = vrot.slane %v389, %v1957
        %v1959 = vmul.f32 %v1953, %v1958
        %v1960 = vmul.f32 %v1954, %v1958
        %v1961 = vlaneseq
        %v1962 = vshrl.u32 %v1961, 7
        %v1963 = vsub.s32 3, %v1962
        %v1964 = vrot.slane %v389, %v1963
        %v1965 = vadd.f32 %v1959, %v1964
        %v1966 = vadd.f32 %v1960, %v1964
        %v1967 = vpack.c.bf16 %v1966, %v1965
        %v1968 = vld [vmem:[%s360] sm:$0xf]
        %v1969 = vld [vmem:[%s360 + $0x4] sm:$0xf]
        %v1970 = vld [vmem:[%s360 + $0x8] sm:$0xf]
        %v1971 = vld [vmem:[%s360 + $0xc] sm:$0xf]
        %v1972 = vlaneseq
        %v1973 = vshrl.u32 %v1972, 7
        %v1974 = vsub.s32 6, %v1973
        %v1975 = vrot.slane %v389, %v1974
        %v1980 = vunpack.c.l.b16 %v1968
        %v1981 = vunpack.c.l.b16 %v1969
        %v1982 = vunpack.c.l.b16 %v1970
        %v1983 = vunpack.c.l.b16 %v1971
        %v1984 = vpack.c.b16 %v1981, %v1980
        %v1985 = vpack.c.b16 %v1983, %v1982
        %v1989 = vsel %vm390, %v1967, 0
        %1991 = vmatprep.subr.bf16.mxu0 0
        %1992 = vmatpush1.bf16.msra.mxu0 %v1984
        %1993 = vmatprep.subr.bf16.mxu0 0
        %1994 = vmatpush1.bf16.msra.mxu0 %v1985
        %1995 = vmatprep.subr.bf16.mxu0 0
        %1996 = vmatpush1.bf16.msra.mxu0 0
        %1997 = vmatprep.subr.bf16.mxu0 0
        %1998 = vmatpush1.bf16.msra.mxu0 0
        %1999 = vmatprep.subr.bf16.mxu0 0
        %2000 = vmatpush1.bf16.msra.mxu0 0
        %2001 = vmatprep.subr.bf16.mxu0 0
        %2002 = vmatpush1.bf16.msra.mxu0 0
        %2003 = vmatprep.subr.bf16.mxu0 0
        %2004 = vmatpush1.bf16.msra.mxu0 0
        %2005 = vmatprep.subr.bf16.mxu0 0
        %2006 = vmatpush1.bf16.msra.mxu0 0
        %2007 = vmatprep.subr.bf16.mxu0 0
        %2008 = vmatpush1.bf16.msra.mxu0 0
        %2009 = vmatprep.subr.bf16.mxu0 0
        %2010 = vmatpush1.bf16.msra.mxu0 0
        %2011 = vmatprep.subr.bf16.mxu0 0
        %2012 = vmatpush1.bf16.msra.mxu0 0
        %2013 = vmatprep.subr.bf16.mxu0 0
        %2014 = vmatpush1.bf16.msra.mxu0 0
        %2015 = vmatprep.subr.bf16.mxu0 0
        %2016 = vmatpush1.bf16.msra.mxu0 0
        %2017 = vmatprep.subr.bf16.mxu0 0
        %2018 = vmatpush1.bf16.msra.mxu0 0
        %2019 = vmatprep.subr.bf16.mxu0 0
        %2020 = vmatpush1.bf16.msra.mxu0 0
        %2021 = vmatprep.subr.bf16.mxu0 0
        %2022 = vmatpush1.bf16.msra.mxu0 0
        %2023 = vmatprep.mubr.bf16.mxu0 0
        %2024 = vmatmul.mubr.bf16.gmra.mrb[0].mxu0 %v1989
        %v2025 = vpop.f32.mrb[0].mxu0
        %v2026 = vadd.f32 %v1975, %v2025
        %v2027 = vpop.f32.mrb[0].mxu0
        %v2028 = vpop.f32.mrb[0].mxu0
        %v2029 = vadd.f32 %v1975, %v2028
        %v2030 = vpop.f32.mrb[0].mxu0
        %2031 = vdwg.mxu0
        %v2032 = vmul.f32 %v2026, 0.5
        %v2033 = vmul.f32 %v2029, 0.5
        %v2034 = vmul.f32 %v2026, 0.044715
        %v2035 = vmul.f32 %v2029, 0.044715
        %v2036 = vmul.f32 %v2034, %v2026
        %v2037 = vmul.f32 %v2035, %v2029
        %v2038 = vmul.f32 %v2036, %v2026
        %v2039 = vmul.f32 %v2037, %v2029
        %v2040 = vadd.f32 %v2026, %v2038
        %v2041 = vadd.f32 %v2029, %v2039
        %v2042 = vmul.f32 %v2040, 0.7978846
        %v2043 = vmul.f32 %v2041, 0.7978846
        %v2044 = vtanh.pop %v2042
        %v2045 = vtanh.pop %v2043
        %v2046 = vadd.f32 %v2044, 1.0
        %v2047 = vadd.f32 %v2045, 1.0
        %v2048 = vmul.f32 %v2032, %v2046
        %v2049 = vmul.f32 %v2033, %v2047
        %v2050 = vpack.c.bf16 %v2049, %v2048
        %v2051 = vld [vmem:[%s365] sm:$0xf]
        %v2052 = vld [vmem:[%s365 + $0x4] sm:$0xf]
        %v2053 = vld [vmem:[%s365 + $0x8] sm:$0xf]
        %v2054 = vld [vmem:[%s365 + $0xc] sm:$0xf]
        %v2055 = vld [vmem:[%s365 + $0x10] sm:$0xf]
        %v2056 = vld [vmem:[%s365 + $0x14] sm:$0xf]
        %v2057 = vld [vmem:[%s365 + $0x18] sm:$0xf]
        %v2058 = vld [vmem:[%s365 + $0x1c] sm:$0xf]
        %v2059 = vlaneseq
        %v2060 = vshrl.u32 %v2059, 7
        %v2061 = vsub.s32 7, %v2060
        %v2062 = vrot.slane %v389, %v2061
        %v2071 = vunpack.c.l.b16 %v2051
        %v2072 = vunpack.c.l.b16 %v2052
        %v2073 = vunpack.c.l.b16 %v2053
        %v2074 = vunpack.c.l.b16 %v2054
        %v2075 = vunpack.c.l.b16 %v2055
        %v2076 = vunpack.c.l.b16 %v2056
        %v2077 = vunpack.c.l.b16 %v2057
        %v2078 = vunpack.c.l.b16 %v2058
        %v2079 = vpack.c.b16 %v2072, %v2071
        %v2080 = vpack.c.b16 %v2074, %v2073
        %v2081 = vpack.c.b16 %v2076, %v2075
        %v2082 = vpack.c.b16 %v2078, %v2077
        %vm2087 = vcmask 523264
        %v2089 = vsel %vm2087, %v2050, 0
        %2091 = vmatprep.subr.bf16.mxu0 0
        %2092 = vmatpush1.bf16.msra.mxu0 %v2079
        %2093 = vmatprep.subr.bf16.mxu0 0
        %2094 = vmatpush1.bf16.msra.mxu0 %v2080
        %2095 = vmatprep.subr.bf16.mxu0 0
        %2096 = vmatpush1.bf16.msra.mxu0 %v2081
        %2097 = vmatprep.subr.bf16.mxu0 0
        %2098 = vmatpush1.bf16.msra.mxu0 %v2082
        %2099 = vmatprep.subr.bf16.mxu0 0
        %2100 = vmatpush1.bf16.msra.mxu0 0
        %2101 = vmatprep.subr.bf16.mxu0 0
        %2102 = vmatpush1.bf16.msra.mxu0 0
        %2103 = vmatprep.subr.bf16.mxu0 0
        %2104 = vmatpush1.bf16.msra.mxu0 0
        %2105 = vmatprep.subr.bf16.mxu0 0
        %2106 = vmatpush1.bf16.msra.mxu0 0
        %2107 = vmatprep.subr.bf16.mxu0 0
        %2108 = vmatpush1.bf16.msra.mxu0 0
        %2109 = vmatprep.subr.bf16.mxu0 0
        %2110 = vmatpush1.bf16.msra.mxu0 0
        %2111 = vmatprep.subr.bf16.mxu0 0
        %2112 = vmatpush1.bf16.msra.mxu0 0
        %2113 = vmatprep.subr.bf16.mxu0 0
        %2114 = vmatpush1.bf16.msra.mxu0 0
        %2115 = vmatprep.subr.bf16.mxu0 0
        %2116 = vmatpush1.bf16.msra.mxu0 0
        %2117 = vmatprep.subr.bf16.mxu0 0
        %2118 = vmatpush1.bf16.msra.mxu0 0
        %2119 = vmatprep.subr.bf16.mxu0 0
        %2120 = vmatpush1.bf16.msra.mxu0 0
        %2121 = vmatprep.subr.bf16.mxu0 0
        %2122 = vmatpush1.bf16.msra.mxu0 0
        %2123 = vmatprep.mubr.bf16.mxu0 0
        %2124 = vmatmul.mubr.bf16.gmra.mrb[0].mxu0 %v2089
        %v2125 = vpop.f32.mrb[0].mxu0
        %v2126 = vadd.f32 %v2062, %v2125
        %v2127 = vpop.f32.mrb[0].mxu0
        %v2128 = vpop.f32.mrb[0].mxu0
        %v2129 = vadd.f32 %v2062, %v2128
        %v2130 = vpop.f32.mrb[0].mxu0
        %2131 = vdwg.mxu0
        %v2132 = vadd.f32 %v1927, %v2126
        %v2133 = vadd.f32 %v1928, %v2129
        %2134 = vst.msk [vmem:[#allocation7] sm:$0xff] %vm390, %v2132
        %2135 = vst.msk [vmem:[#allocation7 + $0x8] sm:$0xff] %vm390, %v2133
        // Predicated region
        $region61: #{tpu_custom_call.1} parent=47 // pred_check
          %p2136 = pneg %p206
        $region62: #{tpu_custom_call.1} parent=47 // pred_check_branch
          %2138 = sbr.rel (%p2136) target = $region64
        $region63: #{tpu_custom_call.1} parent=47 // pred_region
          %s2140 = ssub.s32 256, 256
          %2141 = vsyncadd [#allocation4], %s2140
          %s2142 = sshll.u32 [#allocation7], 4
          %s2143 = int_to_ptr.vmem [resolvable:$true] %s2142
          %2148 = dma.vmem_to_hbm [thread:$0]  %s2143, 256, %s7, [#allocation4], 128, 128, 8
        $region64: #{tpu_custom_call.1} parent=47 // pred_fallthru
          _
        // Predicated region
        $region65: #{tpu_custom_call.1} parent=47 // pred_check
          %p2149 = pneg %p206
        $region66: #{tpu_custom_call.1} parent=47 // pred_check_branch
          %2151 = sbr.rel (%p2149) target = $region68
        $region67: #{tpu_custom_call.1} parent=47 // pred_region
          %2152 = dma.done [#allocation4], 256
        $region68: #{tpu_custom_call.1} parent=47 // pred_fallthru
          _
      $region48: #{tpu_custom_call.1} parent=5 // pred_fallthru
        _
      %p2153 = scmp.le.s32.totalorder 2, %s16
      // Predicated region
      $region69: #{tpu_custom_call.1} parent=5 // pred_check
        %p2154 = pneg %p2153
      $region70: #{tpu_custom_call.1} parent=5 // pred_check_branch
        %2156 = sbr.rel (%p2154) target = $region72
      $region71: #{tpu_custom_call.1} parent=5 // pred_region
        %s2157 = ssub.s32 %s16, 2
      $region72: #{tpu_custom_call.1} parent=5 // pred_fallthru
        _
    $region6: #{tpu_custom_call.1} parent=1 // loop_footer
      %s20 = sadd.s32 1, %s16
    $region7: #{tpu_custom_call.1} parent=1 // loop_footer_branch
      %15 = sbr.rel target = $region3
    $region8: #{tpu_custom_call.1} parent=1 // loop_exit
      _
    %2158 = vsyncpa [#allocation3], 1
    %s2159 = scalar_lea.sflag [#allocation3], 1
    %2160 = vsyncpa %s2159, 1
    %2161 = vsyncpa [#allocation6], 1
    %2162 = vsyncpa [#allocation4], 1
    %s2163 = scalar_lea.sflag [#allocation4], 1
    %2164 = vsyncpa %s2163, 1

</llo_original>
